<compile_context>
chip_gen: v6e
topology: v6e:2x2x1
jax: 0.10.0
libtpu: 0.0.40
codegen_flags: <defaults>
</compile_context>

<pallas_src>
import functools

import jax
import jax.numpy as jnp
from jax.experimental import pallas as pl
from jax.experimental.pallas import tpu as pltpu

NORM_MIN = -22.88
NORM_MAX = -2.31
NORM_RANGE = NORM_MAX - NORM_MIN
BN_EPS = 1e-5

INPUT_DIM = 263
HIDDEN_DIMS = [128, 64, 32, 16, 8]
PAD_DIM = 384  # 263 padded up to 3 * 128 lanes


# ----------------------------- Pallas kernel ------------------------------ #

def autoencoder_kernel(x_ref, gb_ref, *refs, layer_dims):
    """Fused forward pass.

    x_ref:  (B, PAD_DIM)  input, zero-padded beyond INPUT_DIM features
    gb_ref: (n_layers, 2, PAD_DIM) packed BatchNorm [gamma; beta] per layer
    refs:   n_layers weight refs (in, out), then the output ref (B, PAD_DIM)
    """
    n_layers = len(layer_dims)
    out_ref = refs[-1]
    w_refs = refs[:-1]

    h = x_ref[...]
    # TODO(synk): NormLayer definition was not provided; assumed min/max
    # scaling (x - min) / (max - min) and its inverse for denormalize=True.
    h = (h - NORM_MIN) * (1.0 / NORM_RANGE)

    half = n_layers // 2  # first `half` layers are the encoder
    for li in range(n_layers):
        out_dim = layer_dims[li]
        w = w_refs[li][...]                 # (in, out)
        gb = gb_ref[li]                     # (2, PAD_DIM), static index
        g = gb[0:1, :out_dim]               # (1, out)
        be = gb[1:2, :out_dim]              # (1, out)

        # Linear (bias omitted: exactly cancelled by the BN mean subtraction).
        h = jnp.dot(h, w, preferred_element_type=jnp.float32)

        # BatchNorm1d, training-mode stats, single reduction pass.
        mean = jnp.mean(h, axis=0, keepdims=True)
        mean_sq = jnp.mean(h * h, axis=0, keepdims=True)
        var = mean_sq - mean * mean
        inv = jax.lax.rsqrt(var + BN_EPS)
        h = (h - mean) * (inv * g) + be

        # ReLU after every encoder layer and after the FIRST decoder layer only.
        if li <= half:
            h = jnp.maximum(h, 0.0)

    # NormLayer(denormalize=True)
    h = h * NORM_RANGE + NORM_MIN
    out_ref[...] = h.astype(out_ref.dtype)


# ------------------------------- wrapper ----------------------------------- #

@jax.jit
def autoencoder_forward(x, params):
    """x: (B, INPUT_DIM) f32.  params: list of (W[in,out], b, gamma, beta)."""
    n_layers = len(params)
    batch = x.shape[0]

    # Zero-pad the input features to a lane-aligned width.
    x_pad = jnp.pad(x, ((0, 0), (0, PAD_DIM - INPUT_DIM)))

    weights = []
    gb_rows = []
    layer_dims = []
    for li, (w, b, g, be) in enumerate(params):
        del b  # Linear bias is a no-op under training-mode BatchNorm.
        fan_in, fan_out = w.shape
        if li == 0:
            # Pad contraction dim; padded input lanes hit zero weight rows.
            w = jnp.pad(w, ((0, PAD_DIM - fan_in), (0, 0)))
        if li == n_layers - 1:
            # Pad output features; padded columns are sliced off afterwards.
            w = jnp.pad(w, ((0, 0), (0, PAD_DIM - fan_out)))
            layer_dims.append(PAD_DIM)
        else:
            layer_dims.append(fan_out)
        weights.append(w)
        g_row = jnp.pad(g, (0, PAD_DIM - fan_out), constant_values=1.0)
        be_row = jnp.pad(be, (0, PAD_DIM - fan_out))
        gb_rows.append(jnp.stack([g_row, be_row]))
    gb = jnp.stack(gb_rows)  # (n_layers, 2, PAD_DIM)

    flops = 2 * batch * sum(w.shape[0] * w.shape[1] for w in weights)
    bytes_accessed = 4 * (x_pad.size + gb.size + batch * PAD_DIM
                          + sum(w.size for w in weights))

    kernel = functools.partial(autoencoder_kernel, layer_dims=tuple(layer_dims))
    out_pad = pl.pallas_call(
        kernel,
        out_shape=jax.ShapeDtypeStruct((batch, PAD_DIM), jnp.float32),
        in_specs=[pl.BlockSpec(memory_space=pltpu.MemorySpace.VMEM)]
        * (2 + n_layers),
        out_specs=pl.BlockSpec(memory_space=pltpu.MemorySpace.VMEM),
        cost_estimate=pl.CostEstimate(
            flops=flops,
            transcendentals=sum(layer_dims),          # one rsqrt per feature
            bytes_accessed=bytes_accessed),
    )(x_pad, gb, *weights)
    return out_pad[:, :INPUT_DIM]


# ------------------------- pure-JAX reference ------------------------------ #

def autoencoder_ref(x, params):
    h = (x - NORM_MIN) / NORM_RANGE
    n_layers = len(params)
    half = n_layers // 2
    for li, (w, b, g, be) in enumerate(params):
        h = h @ w + b
        mean = h.mean(axis=0, keepdims=True)
        var = ((h - mean) ** 2).mean(axis=0, keepdims=True)
        h = (h - mean) / jnp.sqrt(var + BN_EPS) * g + be
        if li <= half:
            h = jnp.maximum(h, 0.0)
    return h * NORM_RANGE + NORM_MIN


# ------------------------ deterministic param init ------------------------- #

def init_params(key):
    dims = [INPUT_DIM] + HIDDEN_DIMS                      # [263,128,64,32,16,8]
    enc_pairs = [(dims[i], dims[i + 1]) for i in range(len(dims) - 1)]
    dec_pairs = [(dims[i], dims[i - 1]) for i in range(len(dims) - 1, 0, -1)]
    params = []
    for (fan_in, fan_out) in enc_pairs + dec_pairs:
        key, kw, kb, kg, kbe = jax.random.split(key, 5)
        bound = 1.0 / (fan_in ** 0.5)                     # PyTorch Linear init
        w = jax.random.uniform(kw, (fan_in, fan_out), jnp.float32, -bound, bound)
        b = jax.random.uniform(kb, (fan_out,), jnp.float32, -bound, bound)
        gamma = 1.0 + 0.1 * jax.random.normal(kg, (fan_out,), jnp.float32)
        beta = 0.1 * jax.random.normal(kbe, (fan_out,), jnp.float32)
        params.append((w, b, gamma, beta))
    return params


# --------------------------------- main ------------------------------------ #

if __name__ == "__main__":
    key = jax.random.PRNGKey(0)
    key, kx, kp = jax.random.split(key, 3)

    batch = 8
    # inputs roughly in the module's expected data range [-22.88, -2.31]
    x = jax.random.uniform(kx, (batch, INPUT_DIM), jnp.float32,
                           NORM_MIN, NORM_MAX)
    params = init_params(kp)

    out = autoencoder_forward(x, params)
    out = jax.block_until_ready(out)

    ref = autoencoder_ref(x, params)
    assert out.shape == (batch, INPUT_DIM)
    assert jnp.allclose(out, ref, atol=1e-3, rtol=1e-3), (
        float(jnp.max(jnp.abs(out - ref))))

    print("KERNEL_OK")
</pallas_src>

<mosaic_0001>
module attributes {stable_mosaic.version = 11 : i64} {
  func.func @autoencoder_kernel(%arg0: memref<8x384xf32, #tpu.memory_space<vmem>>, %arg1: memref<10x2x384xf32, #tpu.memory_space<vmem>>, %arg2: memref<384x128xf32, #tpu.memory_space<vmem>>, %arg3: memref<128x64xf32, #tpu.memory_space<vmem>>, %arg4: memref<64x32xf32, #tpu.memory_space<vmem>>, %arg5: memref<32x16xf32, #tpu.memory_space<vmem>>, %arg6: memref<16x8xf32, #tpu.memory_space<vmem>>, %arg7: memref<8x16xf32, #tpu.memory_space<vmem>>, %arg8: memref<16x32xf32, #tpu.memory_space<vmem>>, %arg9: memref<32x64xf32, #tpu.memory_space<vmem>>, %arg10: memref<64x128xf32, #tpu.memory_space<vmem>>, %arg11: memref<128x384xf32, #tpu.memory_space<vmem>>, %arg12: memref<8x384xf32, #tpu.memory_space<vmem>>) attributes {dimension_semantics = [], scalar_prefetch = 0 : i64, scratch_operands = 0 : i64, tpu.core_type = #tpu.core_type<tc>} {
    %c0 = arith.constant 0 : index
    %c0_0 = arith.constant 0 : index
    %0 = vector.load %arg0[%c0, %c0_0] : memref<8x384xf32, #tpu.memory_space<vmem>>, vector<8x384xf32>
    %cst = arith.constant -2.288000e+01 : f32
    %1 = vector.broadcast %cst : f32 to vector<8x384xf32>
    %2 = arith.subf %0, %1 : vector<8x384xf32>
    %cst_1 = arith.constant 0.0486144871 : f32
    %3 = vector.broadcast %cst_1 : f32 to vector<8x384xf32>
    %4 = arith.mulf %2, %3 : vector<8x384xf32>
    %c0_2 = arith.constant 0 : index
    %c0_3 = arith.constant 0 : index
    %5 = vector.load %arg2[%c0_2, %c0_3] : memref<384x128xf32, #tpu.memory_space<vmem>>, vector<384x128xf32>
    %c0_4 = arith.constant 0 : index
    %c0_5 = arith.constant 0 : index
    %c0_6 = arith.constant 0 : index
    %6 = vector.load %arg1[%c0_4, %c0_5, %c0_6] : memref<10x2x384xf32, #tpu.memory_space<vmem>>, vector<1x2x384xf32>
    %7 = vector.shape_cast %6 : vector<1x2x384xf32> to vector<2x384xf32>
    %8 = vector.extract_strided_slice %7 {offsets = [0, 0], sizes = [1, 128], strides = [1, 1]} : vector<2x384xf32> to vector<1x128xf32>
    %9 = vector.extract_strided_slice %7 {offsets = [1, 0], sizes = [1, 128], strides = [1, 1]} : vector<2x384xf32> to vector<1x128xf32>
    %cst_7 = arith.constant dense<0.000000e+00> : vector<8x128xf32>
    %10 = tpu.matmul %4, %5, %cst_7 {dimension_numbers = #tpu.dot_dimension_numbers<[1], [0], [0], [1], [0, 0, 1, 1], [], []>} : vector<8x384xf32>, vector<384x128xf32>, vector<8x128xf32> -> vector<8x128xf32>
    %cst_8 = arith.constant dense<0.000000e+00> : vector<128xf32>
    %11 = vector.multi_reduction <add>, %10, %cst_8 [0] : vector<8x128xf32> to vector<128xf32>
    %12 = vector.shape_cast %11 : vector<128xf32> to vector<1x128xf32>
    %cst_9 = arith.constant 8.000000e+00 : f32
    %13 = vector.broadcast %cst_9 : f32 to vector<1x128xf32>
    %14 = arith.divf %12, %13 : vector<1x128xf32>
    %15 = arith.mulf %10, %10 : vector<8x128xf32>
    %cst_10 = arith.constant dense<0.000000e+00> : vector<128xf32>
    %16 = vector.multi_reduction <add>, %15, %cst_10 [0] : vector<8x128xf32> to vector<128xf32>
    %17 = vector.shape_cast %16 : vector<128xf32> to vector<1x128xf32>
    %cst_11 = arith.constant 8.000000e+00 : f32
    %18 = vector.broadcast %cst_11 : f32 to vector<1x128xf32>
    %19 = arith.divf %17, %18 : vector<1x128xf32>
    %20 = arith.mulf %14, %14 : vector<1x128xf32>
    %21 = arith.subf %19, %20 : vector<1x128xf32>
    %cst_12 = arith.constant 9.99999974E-6 : f32
    %22 = vector.broadcast %cst_12 : f32 to vector<1x128xf32>
    %23 = arith.addf %21, %22 : vector<1x128xf32>
    %24 = math.rsqrt %23 : vector<1x128xf32>
    %25 = vector.broadcast %14 : vector<1x128xf32> to vector<8x128xf32>
    %26 = arith.subf %10, %25 : vector<8x128xf32>
    %27 = arith.mulf %24, %8 : vector<1x128xf32>
    %28 = vector.broadcast %27 : vector<1x128xf32> to vector<8x128xf32>
    %29 = arith.mulf %26, %28 : vector<8x128xf32>
    %30 = vector.broadcast %9 : vector<1x128xf32> to vector<8x128xf32>
    %31 = arith.addf %29, %30 : vector<8x128xf32>
    %cst_13 = arith.constant 0.000000e+00 : f32
    %32 = vector.broadcast %cst_13 : f32 to vector<8x128xf32>
    %33 = arith.maximumf %31, %32 : vector<8x128xf32>
    %c0_14 = arith.constant 0 : index
    %c0_15 = arith.constant 0 : index
    %34 = vector.load %arg3[%c0_14, %c0_15] : memref<128x64xf32, #tpu.memory_space<vmem>>, vector<128x64xf32>
    %c1 = arith.constant 1 : index
    %c0_16 = arith.constant 0 : index
    %c0_17 = arith.constant 0 : index
    %35 = vector.load %arg1[%c1, %c0_16, %c0_17] : memref<10x2x384xf32, #tpu.memory_space<vmem>>, vector<1x2x384xf32>
    %36 = vector.shape_cast %35 : vector<1x2x384xf32> to vector<2x384xf32>
    %37 = vector.extract_strided_slice %36 {offsets = [0, 0], sizes = [1, 64], strides = [1, 1]} : vector<2x384xf32> to vector<1x64xf32>
    %38 = vector.extract_strided_slice %36 {offsets = [1, 0], sizes = [1, 64], strides = [1, 1]} : vector<2x384xf32> to vector<1x64xf32>
    %cst_18 = arith.constant dense<0.000000e+00> : vector<8x64xf32>
    %39 = tpu.matmul %33, %34, %cst_18 {dimension_numbers = #tpu.dot_dimension_numbers<[1], [0], [0], [1], [0, 0, 1, 1], [], []>} : vector<8x128xf32>, vector<128x64xf32>, vector<8x64xf32> -> vector<8x64xf32>
    %cst_19 = arith.constant dense<0.000000e+00> : vector<64xf32>
    %40 = vector.multi_reduction <add>, %39, %cst_19 [0] : vector<8x64xf32> to vector<64xf32>
    %41 = vector.shape_cast %40 : vector<64xf32> to vector<1x64xf32>
    %cst_20 = arith.constant 8.000000e+00 : f32
    %42 = vector.broadcast %cst_20 : f32 to vector<1x64xf32>
    %43 = arith.divf %41, %42 : vector<1x64xf32>
    %44 = arith.mulf %39, %39 : vector<8x64xf32>
    %cst_21 = arith.constant dense<0.000000e+00> : vector<64xf32>
    %45 = vector.multi_reduction <add>, %44, %cst_21 [0] : vector<8x64xf32> to vector<64xf32>
    %46 = vector.shape_cast %45 : vector<64xf32> to vector<1x64xf32>
    %cst_22 = arith.constant 8.000000e+00 : f32
    %47 = vector.broadcast %cst_22 : f32 to vector<1x64xf32>
    %48 = arith.divf %46, %47 : vector<1x64xf32>
    %49 = arith.mulf %43, %43 : vector<1x64xf32>
    %50 = arith.subf %48, %49 : vector<1x64xf32>
    %cst_23 = arith.constant 9.99999974E-6 : f32
    %51 = vector.broadcast %cst_23 : f32 to vector<1x64xf32>
    %52 = arith.addf %50, %51 : vector<1x64xf32>
    %53 = math.rsqrt %52 : vector<1x64xf32>
    %54 = vector.broadcast %43 : vector<1x64xf32> to vector<8x64xf32>
    %55 = arith.subf %39, %54 : vector<8x64xf32>
    %56 = arith.mulf %53, %37 : vector<1x64xf32>
    %57 = vector.broadcast %56 : vector<1x64xf32> to vector<8x64xf32>
    %58 = arith.mulf %55, %57 : vector<8x64xf32>
    %59 = vector.broadcast %38 : vector<1x64xf32> to vector<8x64xf32>
    %60 = arith.addf %58, %59 : vector<8x64xf32>
    %cst_24 = arith.constant 0.000000e+00 : f32
    %61 = vector.broadcast %cst_24 : f32 to vector<8x64xf32>
    %62 = arith.maximumf %60, %61 : vector<8x64xf32>
    %c0_25 = arith.constant 0 : index
    %c0_26 = arith.constant 0 : index
    %63 = vector.load %arg4[%c0_25, %c0_26] : memref<64x32xf32, #tpu.memory_space<vmem>>, vector<64x32xf32>
    %c2 = arith.constant 2 : index
    %c0_27 = arith.constant 0 : index
    %c0_28 = arith.constant 0 : index
    %64 = vector.load %arg1[%c2, %c0_27, %c0_28] : memref<10x2x384xf32, #tpu.memory_space<vmem>>, vector<1x2x384xf32>
    %65 = vector.shape_cast %64 : vector<1x2x384xf32> to vector<2x384xf32>
    %66 = vector.extract_strided_slice %65 {offsets = [0, 0], sizes = [1, 32], strides = [1, 1]} : vector<2x384xf32> to vector<1x32xf32>
    %67 = vector.extract_strided_slice %65 {offsets = [1, 0], sizes = [1, 32], strides = [1, 1]} : vector<2x384xf32> to vector<1x32xf32>
    %cst_29 = arith.constant dense<0.000000e+00> : vector<8x32xf32>
    %68 = tpu.matmul %62, %63, %cst_29 {dimension_numbers = #tpu.dot_dimension_numbers<[1], [0], [0], [1], [0, 0, 1, 1], [], []>} : vector<8x64xf32>, vector<64x32xf32>, vector<8x32xf32> -> vector<8x32xf32>
    %cst_30 = arith.constant dense<0.000000e+00> : vector<32xf32>
    %69 = vector.multi_reduction <add>, %68, %cst_30 [0] : vector<8x32xf32> to vector<32xf32>
    %70 = vector.shape_cast %69 : vector<32xf32> to vector<1x32xf32>
    %cst_31 = arith.constant 8.000000e+00 : f32
    %71 = vector.broadcast %cst_31 : f32 to vector<1x32xf32>
    %72 = arith.divf %70, %71 : vector<1x32xf32>
    %73 = arith.mulf %68, %68 : vector<8x32xf32>
    %cst_32 = arith.constant dense<0.000000e+00> : vector<32xf32>
    %74 = vector.multi_reduction <add>, %73, %cst_32 [0] : vector<8x32xf32> to vector<32xf32>
    %75 = vector.shape_cast %74 : vector<32xf32> to vector<1x32xf32>
    %cst_33 = arith.constant 8.000000e+00 : f32
    %76 = vector.broadcast %cst_33 : f32 to vector<1x32xf32>
    %77 = arith.divf %75, %76 : vector<1x32xf32>
    %78 = arith.mulf %72, %72 : vector<1x32xf32>
    %79 = arith.subf %77, %78 : vector<1x32xf32>
    %cst_34 = arith.constant 9.99999974E-6 : f32
    %80 = vector.broadcast %cst_34 : f32 to vector<1x32xf32>
    %81 = arith.addf %79, %80 : vector<1x32xf32>
    %82 = math.rsqrt %81 : vector<1x32xf32>
    %83 = vector.broadcast %72 : vector<1x32xf32> to vector<8x32xf32>
    %84 = arith.subf %68, %83 : vector<8x32xf32>
    %85 = arith.mulf %82, %66 : vector<1x32xf32>
    %86 = vector.broadcast %85 : vector<1x32xf32> to vector<8x32xf32>
    %87 = arith.mulf %84, %86 : vector<8x32xf32>
    %88 = vector.broadcast %67 : vector<1x32xf32> to vector<8x32xf32>
    %89 = arith.addf %87, %88 : vector<8x32xf32>
    %cst_35 = arith.constant 0.000000e+00 : f32
    %90 = vector.broadcast %cst_35 : f32 to vector<8x32xf32>
    %91 = arith.maximumf %89, %90 : vector<8x32xf32>
    %c0_36 = arith.constant 0 : index
    %c0_37 = arith.constant 0 : index
    %92 = vector.load %arg5[%c0_36, %c0_37] : memref<32x16xf32, #tpu.memory_space<vmem>>, vector<32x16xf32>
    %c3 = arith.constant 3 : index
    %c0_38 = arith.constant 0 : index
    %c0_39 = arith.constant 0 : index
    %93 = vector.load %arg1[%c3, %c0_38, %c0_39] : memref<10x2x384xf32, #tpu.memory_space<vmem>>, vector<1x2x384xf32>
    %94 = vector.shape_cast %93 : vector<1x2x384xf32> to vector<2x384xf32>
    %95 = vector.extract_strided_slice %94 {offsets = [0, 0], sizes = [1, 16], strides = [1, 1]} : vector<2x384xf32> to vector<1x16xf32>
    %96 = vector.extract_strided_slice %94 {offsets = [1, 0], sizes = [1, 16], strides = [1, 1]} : vector<2x384xf32> to vector<1x16xf32>
    %cst_40 = arith.constant dense<0.000000e+00> : vector<8x16xf32>
    %97 = tpu.matmul %91, %92, %cst_40 {dimension_numbers = #tpu.dot_dimension_numbers<[1], [0], [0], [1], [0, 0, 1, 1], [], []>} : vector<8x32xf32>, vector<32x16xf32>, vector<8x16xf32> -> vector<8x16xf32>
    %cst_41 = arith.constant dense<0.000000e+00> : vector<16xf32>
    %98 = vector.multi_reduction <add>, %97, %cst_41 [0] : vector<8x16xf32> to vector<16xf32>
    %99 = vector.shape_cast %98 : vector<16xf32> to vector<1x16xf32>
    %cst_42 = arith.constant 8.000000e+00 : f32
    %100 = vector.broadcast %cst_42 : f32 to vector<1x16xf32>
    %101 = arith.divf %99, %100 : vector<1x16xf32>
    %102 = arith.mulf %97, %97 : vector<8x16xf32>
    %cst_43 = arith.constant dense<0.000000e+00> : vector<16xf32>
    %103 = vector.multi_reduction <add>, %102, %cst_43 [0] : vector<8x16xf32> to vector<16xf32>
    %104 = vector.shape_cast %103 : vector<16xf32> to vector<1x16xf32>
    %cst_44 = arith.constant 8.000000e+00 : f32
    %105 = vector.broadcast %cst_44 : f32 to vector<1x16xf32>
    %106 = arith.divf %104, %105 : vector<1x16xf32>
    %107 = arith.mulf %101, %101 : vector<1x16xf32>
    %108 = arith.subf %106, %107 : vector<1x16xf32>
    %cst_45 = arith.constant 9.99999974E-6 : f32
    %109 = vector.broadcast %cst_45 : f32 to vector<1x16xf32>
    %110 = arith.addf %108, %109 : vector<1x16xf32>
    %111 = math.rsqrt %110 : vector<1x16xf32>
    %112 = vector.broadcast %101 : vector<1x16xf32> to vector<8x16xf32>
    %113 = arith.subf %97, %112 : vector<8x16xf32>
    %114 = arith.mulf %111, %95 : vector<1x16xf32>
    %115 = vector.broadcast %114 : vector<1x16xf32> to vector<8x16xf32>
    %116 = arith.mulf %113, %115 : vector<8x16xf32>
    %117 = vector.broadcast %96 : vector<1x16xf32> to vector<8x16xf32>
    %118 = arith.addf %116, %117 : vector<8x16xf32>
    %cst_46 = arith.constant 0.000000e+00 : f32
    %119 = vector.broadcast %cst_46 : f32 to vector<8x16xf32>
    %120 = arith.maximumf %118, %119 : vector<8x16xf32>
    %c0_47 = arith.constant 0 : index
    %c0_48 = arith.constant 0 : index
    %121 = vector.load %arg6[%c0_47, %c0_48] : memref<16x8xf32, #tpu.memory_space<vmem>>, vector<16x8xf32>
    %c4 = arith.constant 4 : index
    %c0_49 = arith.constant 0 : index
    %c0_50 = arith.constant 0 : index
    %122 = vector.load %arg1[%c4, %c0_49, %c0_50] : memref<10x2x384xf32, #tpu.memory_space<vmem>>, vector<1x2x384xf32>
    %123 = vector.shape_cast %122 : vector<1x2x384xf32> to vector<2x384xf32>
    %124 = vector.extract_strided_slice %123 {offsets = [0, 0], sizes = [1, 8], strides = [1, 1]} : vector<2x384xf32> to vector<1x8xf32>
    %125 = vector.extract_strided_slice %123 {offsets = [1, 0], sizes = [1, 8], strides = [1, 1]} : vector<2x384xf32> to vector<1x8xf32>
    %cst_51 = arith.constant dense<0.000000e+00> : vector<8x8xf32>
    %126 = tpu.matmul %120, %121, %cst_51 {dimension_numbers = #tpu.dot_dimension_numbers<[1], [0], [0], [1], [0, 0, 1, 1], [], []>} : vector<8x16xf32>, vector<16x8xf32>, vector<8x8xf32> -> vector<8x8xf32>
    %cst_52 = arith.constant dense<0.000000e+00> : vector<8xf32>
    %127 = vector.multi_reduction <add>, %126, %cst_52 [0] : vector<8x8xf32> to vector<8xf32>
    %128 = vector.shape_cast %127 : vector<8xf32> to vector<1x8xf32>
    %cst_53 = arith.constant 8.000000e+00 : f32
    %129 = vector.broadcast %cst_53 : f32 to vector<1x8xf32>
    %130 = arith.divf %128, %129 : vector<1x8xf32>
    %131 = arith.mulf %126, %126 : vector<8x8xf32>
    %cst_54 = arith.constant dense<0.000000e+00> : vector<8xf32>
    %132 = vector.multi_reduction <add>, %131, %cst_54 [0] : vector<8x8xf32> to vector<8xf32>
    %133 = vector.shape_cast %132 : vector<8xf32> to vector<1x8xf32>
    %cst_55 = arith.constant 8.000000e+00 : f32
    %134 = vector.broadcast %cst_55 : f32 to vector<1x8xf32>
    %135 = arith.divf %133, %134 : vector<1x8xf32>
    %136 = arith.mulf %130, %130 : vector<1x8xf32>
    %137 = arith.subf %135, %136 : vector<1x8xf32>
    %cst_56 = arith.constant 9.99999974E-6 : f32
    %138 = vector.broadcast %cst_56 : f32 to vector<1x8xf32>
    %139 = arith.addf %137, %138 : vector<1x8xf32>
    %140 = math.rsqrt %139 : vector<1x8xf32>
    %141 = vector.broadcast %130 : vector<1x8xf32> to vector<8x8xf32>
    %142 = arith.subf %126, %141 : vector<8x8xf32>
    %143 = arith.mulf %140, %124 : vector<1x8xf32>
    %144 = vector.broadcast %143 : vector<1x8xf32> to vector<8x8xf32>
    %145 = arith.mulf %142, %144 : vector<8x8xf32>
    %146 = vector.broadcast %125 : vector<1x8xf32> to vector<8x8xf32>
    %147 = arith.addf %145, %146 : vector<8x8xf32>
    %cst_57 = arith.constant 0.000000e+00 : f32
    %148 = vector.broadcast %cst_57 : f32 to vector<8x8xf32>
    %149 = arith.maximumf %147, %148 : vector<8x8xf32>
    %c0_58 = arith.constant 0 : index
    %c0_59 = arith.constant 0 : index
    %150 = vector.load %arg7[%c0_58, %c0_59] : memref<8x16xf32, #tpu.memory_space<vmem>>, vector<8x16xf32>
    %c5 = arith.constant 5 : index
    %c0_60 = arith.constant 0 : index
    %c0_61 = arith.constant 0 : index
    %151 = vector.load %arg1[%c5, %c0_60, %c0_61] : memref<10x2x384xf32, #tpu.memory_space<vmem>>, vector<1x2x384xf32>
    %152 = vector.shape_cast %151 : vector<1x2x384xf32> to vector<2x384xf32>
    %153 = vector.extract_strided_slice %152 {offsets = [0, 0], sizes = [1, 16], strides = [1, 1]} : vector<2x384xf32> to vector<1x16xf32>
    %154 = vector.extract_strided_slice %152 {offsets = [1, 0], sizes = [1, 16], strides = [1, 1]} : vector<2x384xf32> to vector<1x16xf32>
    %cst_62 = arith.constant dense<0.000000e+00> : vector<8x16xf32>
    %155 = tpu.matmul %149, %150, %cst_62 {dimension_numbers = #tpu.dot_dimension_numbers<[1], [0], [0], [1], [0, 0, 1, 1], [], []>} : vector<8x8xf32>, vector<8x16xf32>, vector<8x16xf32> -> vector<8x16xf32>
    %cst_63 = arith.constant dense<0.000000e+00> : vector<16xf32>
    %156 = vector.multi_reduction <add>, %155, %cst_63 [0] : vector<8x16xf32> to vector<16xf32>
    %157 = vector.shape_cast %156 : vector<16xf32> to vector<1x16xf32>
    %cst_64 = arith.constant 8.000000e+00 : f32
    %158 = vector.broadcast %cst_64 : f32 to vector<1x16xf32>
    %159 = arith.divf %157, %158 : vector<1x16xf32>
    %160 = arith.mulf %155, %155 : vector<8x16xf32>
    %cst_65 = arith.constant dense<0.000000e+00> : vector<16xf32>
    %161 = vector.multi_reduction <add>, %160, %cst_65 [0] : vector<8x16xf32> to vector<16xf32>
    %162 = vector.shape_cast %161 : vector<16xf32> to vector<1x16xf32>
    %cst_66 = arith.constant 8.000000e+00 : f32
    %163 = vector.broadcast %cst_66 : f32 to vector<1x16xf32>
    %164 = arith.divf %162, %163 : vector<1x16xf32>
    %165 = arith.mulf %159, %159 : vector<1x16xf32>
    %166 = arith.subf %164, %165 : vector<1x16xf32>
    %cst_67 = arith.constant 9.99999974E-6 : f32
    %167 = vector.broadcast %cst_67 : f32 to vector<1x16xf32>
    %168 = arith.addf %166, %167 : vector<1x16xf32>
    %169 = math.rsqrt %168 : vector<1x16xf32>
    %170 = vector.broadcast %159 : vector<1x16xf32> to vector<8x16xf32>
    %171 = arith.subf %155, %170 : vector<8x16xf32>
    %172 = arith.mulf %169, %153 : vector<1x16xf32>
    %173 = vector.broadcast %172 : vector<1x16xf32> to vector<8x16xf32>
    %174 = arith.mulf %171, %173 : vector<8x16xf32>
    %175 = vector.broadcast %154 : vector<1x16xf32> to vector<8x16xf32>
    %176 = arith.addf %174, %175 : vector<8x16xf32>
    %cst_68 = arith.constant 0.000000e+00 : f32
    %177 = vector.broadcast %cst_68 : f32 to vector<8x16xf32>
    %178 = arith.maximumf %176, %177 : vector<8x16xf32>
    %c0_69 = arith.constant 0 : index
    %c0_70 = arith.constant 0 : index
    %179 = vector.load %arg8[%c0_69, %c0_70] : memref<16x32xf32, #tpu.memory_space<vmem>>, vector<16x32xf32>
    %c6 = arith.constant 6 : index
    %c0_71 = arith.constant 0 : index
    %c0_72 = arith.constant 0 : index
    %180 = vector.load %arg1[%c6, %c0_71, %c0_72] : memref<10x2x384xf32, #tpu.memory_space<vmem>>, vector<1x2x384xf32>
    %181 = vector.shape_cast %180 : vector<1x2x384xf32> to vector<2x384xf32>
    %182 = vector.extract_strided_slice %181 {offsets = [0, 0], sizes = [1, 32], strides = [1, 1]} : vector<2x384xf32> to vector<1x32xf32>
    %183 = vector.extract_strided_slice %181 {offsets = [1, 0], sizes = [1, 32], strides = [1, 1]} : vector<2x384xf32> to vector<1x32xf32>
    %cst_73 = arith.constant dense<0.000000e+00> : vector<8x32xf32>
    %184 = tpu.matmul %178, %179, %cst_73 {dimension_numbers = #tpu.dot_dimension_numbers<[1], [0], [0], [1], [0, 0, 1, 1], [], []>} : vector<8x16xf32>, vector<16x32xf32>, vector<8x32xf32> -> vector<8x32xf32>
    %cst_74 = arith.constant dense<0.000000e+00> : vector<32xf32>
    %185 = vector.multi_reduction <add>, %184, %cst_74 [0] : vector<8x32xf32> to vector<32xf32>
    %186 = vector.shape_cast %185 : vector<32xf32> to vector<1x32xf32>
    %cst_75 = arith.constant 8.000000e+00 : f32
    %187 = vector.broadcast %cst_75 : f32 to vector<1x32xf32>
    %188 = arith.divf %186, %187 : vector<1x32xf32>
    %189 = arith.mulf %184, %184 : vector<8x32xf32>
    %cst_76 = arith.constant dense<0.000000e+00> : vector<32xf32>
    %190 = vector.multi_reduction <add>, %189, %cst_76 [0] : vector<8x32xf32> to vector<32xf32>
    %191 = vector.shape_cast %190 : vector<32xf32> to vector<1x32xf32>
    %cst_77 = arith.constant 8.000000e+00 : f32
    %192 = vector.broadcast %cst_77 : f32 to vector<1x32xf32>
    %193 = arith.divf %191, %192 : vector<1x32xf32>
    %194 = arith.mulf %188, %188 : vector<1x32xf32>
    %195 = arith.subf %193, %194 : vector<1x32xf32>
    %cst_78 = arith.constant 9.99999974E-6 : f32
    %196 = vector.broadcast %cst_78 : f32 to vector<1x32xf32>
    %197 = arith.addf %195, %196 : vector<1x32xf32>
    %198 = math.rsqrt %197 : vector<1x32xf32>
    %199 = vector.broadcast %188 : vector<1x32xf32> to vector<8x32xf32>
    %200 = arith.subf %184, %199 : vector<8x32xf32>
    %201 = arith.mulf %198, %182 : vector<1x32xf32>
    %202 = vector.broadcast %201 : vector<1x32xf32> to vector<8x32xf32>
    %203 = arith.mulf %200, %202 : vector<8x32xf32>
    %204 = vector.broadcast %183 : vector<1x32xf32> to vector<8x32xf32>
    %205 = arith.addf %203, %204 : vector<8x32xf32>
    %c0_79 = arith.constant 0 : index
    %c0_80 = arith.constant 0 : index
    %206 = vector.load %arg9[%c0_79, %c0_80] : memref<32x64xf32, #tpu.memory_space<vmem>>, vector<32x64xf32>
    %c7 = arith.constant 7 : index
    %c0_81 = arith.constant 0 : index
    %c0_82 = arith.constant 0 : index
    %207 = vector.load %arg1[%c7, %c0_81, %c0_82] : memref<10x2x384xf32, #tpu.memory_space<vmem>>, vector<1x2x384xf32>
    %208 = vector.shape_cast %207 : vector<1x2x384xf32> to vector<2x384xf32>
    %209 = vector.extract_strided_slice %208 {offsets = [0, 0], sizes = [1, 64], strides = [1, 1]} : vector<2x384xf32> to vector<1x64xf32>
    %210 = vector.extract_strided_slice %208 {offsets = [1, 0], sizes = [1, 64], strides = [1, 1]} : vector<2x384xf32> to vector<1x64xf32>
    %cst_83 = arith.constant dense<0.000000e+00> : vector<8x64xf32>
    %211 = tpu.matmul %205, %206, %cst_83 {dimension_numbers = #tpu.dot_dimension_numbers<[1], [0], [0], [1], [0, 0, 1, 1], [], []>} : vector<8x32xf32>, vector<32x64xf32>, vector<8x64xf32> -> vector<8x64xf32>
    %cst_84 = arith.constant dense<0.000000e+00> : vector<64xf32>
    %212 = vector.multi_reduction <add>, %211, %cst_84 [0] : vector<8x64xf32> to vector<64xf32>
    %213 = vector.shape_cast %212 : vector<64xf32> to vector<1x64xf32>
    %cst_85 = arith.constant 8.000000e+00 : f32
    %214 = vector.broadcast %cst_85 : f32 to vector<1x64xf32>
    %215 = arith.divf %213, %214 : vector<1x64xf32>
    %216 = arith.mulf %211, %211 : vector<8x64xf32>
    %cst_86 = arith.constant dense<0.000000e+00> : vector<64xf32>
    %217 = vector.multi_reduction <add>, %216, %cst_86 [0] : vector<8x64xf32> to vector<64xf32>
    %218 = vector.shape_cast %217 : vector<64xf32> to vector<1x64xf32>
    %cst_87 = arith.constant 8.000000e+00 : f32
    %219 = vector.broadcast %cst_87 : f32 to vector<1x64xf32>
    %220 = arith.divf %218, %219 : vector<1x64xf32>
    %221 = arith.mulf %215, %215 : vector<1x64xf32>
    %222 = arith.subf %220, %221 : vector<1x64xf32>
    %cst_88 = arith.constant 9.99999974E-6 : f32
    %223 = vector.broadcast %cst_88 : f32 to vector<1x64xf32>
    %224 = arith.addf %222, %223 : vector<1x64xf32>
    %225 = math.rsqrt %224 : vector<1x64xf32>
    %226 = vector.broadcast %215 : vector<1x64xf32> to vector<8x64xf32>
    %227 = arith.subf %211, %226 : vector<8x64xf32>
    %228 = arith.mulf %225, %209 : vector<1x64xf32>
    %229 = vector.broadcast %228 : vector<1x64xf32> to vector<8x64xf32>
    %230 = arith.mulf %227, %229 : vector<8x64xf32>
    %231 = vector.broadcast %210 : vector<1x64xf32> to vector<8x64xf32>
    %232 = arith.addf %230, %231 : vector<8x64xf32>
    %c0_89 = arith.constant 0 : index
    %c0_90 = arith.constant 0 : index
    %233 = vector.load %arg10[%c0_89, %c0_90] : memref<64x128xf32, #tpu.memory_space<vmem>>, vector<64x128xf32>
    %c8 = arith.constant 8 : index
    %c0_91 = arith.constant 0 : index
    %c0_92 = arith.constant 0 : index
    %234 = vector.load %arg1[%c8, %c0_91, %c0_92] : memref<10x2x384xf32, #tpu.memory_space<vmem>>, vector<1x2x384xf32>
    %235 = vector.shape_cast %234 : vector<1x2x384xf32> to vector<2x384xf32>
    %236 = vector.extract_strided_slice %235 {offsets = [0, 0], sizes = [1, 128], strides = [1, 1]} : vector<2x384xf32> to vector<1x128xf32>
    %237 = vector.extract_strided_slice %235 {offsets = [1, 0], sizes = [1, 128], strides = [1, 1]} : vector<2x384xf32> to vector<1x128xf32>
    %cst_93 = arith.constant dense<0.000000e+00> : vector<8x128xf32>
    %238 = tpu.matmul %232, %233, %cst_93 {dimension_numbers = #tpu.dot_dimension_numbers<[1], [0], [0], [1], [0, 0, 1, 1], [], []>} : vector<8x64xf32>, vector<64x128xf32>, vector<8x128xf32> -> vector<8x128xf32>
    %cst_94 = arith.constant dense<0.000000e+00> : vector<128xf32>
    %239 = vector.multi_reduction <add>, %238, %cst_94 [0] : vector<8x128xf32> to vector<128xf32>
    %240 = vector.shape_cast %239 : vector<128xf32> to vector<1x128xf32>
    %cst_95 = arith.constant 8.000000e+00 : f32
    %241 = vector.broadcast %cst_95 : f32 to vector<1x128xf32>
    %242 = arith.divf %240, %241 : vector<1x128xf32>
    %243 = arith.mulf %238, %238 : vector<8x128xf32>
    %cst_96 = arith.constant dense<0.000000e+00> : vector<128xf32>
    %244 = vector.multi_reduction <add>, %243, %cst_96 [0] : vector<8x128xf32> to vector<128xf32>
    %245 = vector.shape_cast %244 : vector<128xf32> to vector<1x128xf32>
    %cst_97 = arith.constant 8.000000e+00 : f32
    %246 = vector.broadcast %cst_97 : f32 to vector<1x128xf32>
    %247 = arith.divf %245, %246 : vector<1x128xf32>
    %248 = arith.mulf %242, %242 : vector<1x128xf32>
    %249 = arith.subf %247, %248 : vector<1x128xf32>
    %cst_98 = arith.constant 9.99999974E-6 : f32
    %250 = vector.broadcast %cst_98 : f32 to vector<1x128xf32>
    %251 = arith.addf %249, %250 : vector<1x128xf32>
    %252 = math.rsqrt %251 : vector<1x128xf32>
    %253 = vector.broadcast %242 : vector<1x128xf32> to vector<8x128xf32>
    %254 = arith.subf %238, %253 : vector<8x128xf32>
    %255 = arith.mulf %252, %236 : vector<1x128xf32>
    %256 = vector.broadcast %255 : vector<1x128xf32> to vector<8x128xf32>
    %257 = arith.mulf %254, %256 : vector<8x128xf32>
    %258 = vector.broadcast %237 : vector<1x128xf32> to vector<8x128xf32>
    %259 = arith.addf %257, %258 : vector<8x128xf32>
    %c0_99 = arith.constant 0 : index
    %c0_100 = arith.constant 0 : index
    %260 = vector.load %arg11[%c0_99, %c0_100] : memref<128x384xf32, #tpu.memory_space<vmem>>, vector<128x384xf32>
    %c9 = arith.constant 9 : index
    %c0_101 = arith.constant 0 : index
    %c0_102 = arith.constant 0 : index
    %261 = vector.load %arg1[%c9, %c0_101, %c0_102] : memref<10x2x384xf32, #tpu.memory_space<vmem>>, vector<1x2x384xf32>
    %262 = vector.shape_cast %261 : vector<1x2x384xf32> to vector<2x384xf32>
    %263 = vector.extract_strided_slice %262 {offsets = [0, 0], sizes = [1, 384], strides = [1, 1]} : vector<2x384xf32> to vector<1x384xf32>
    %264 = vector.extract_strided_slice %262 {offsets = [1, 0], sizes = [1, 384], strides = [1, 1]} : vector<2x384xf32> to vector<1x384xf32>
    %cst_103 = arith.constant dense<0.000000e+00> : vector<8x384xf32>
    %265 = tpu.matmul %259, %260, %cst_103 {dimension_numbers = #tpu.dot_dimension_numbers<[1], [0], [0], [1], [0, 0, 1, 1], [], []>} : vector<8x128xf32>, vector<128x384xf32>, vector<8x384xf32> -> vector<8x384xf32>
    %cst_104 = arith.constant dense<0.000000e+00> : vector<384xf32>
    %266 = vector.multi_reduction <add>, %265, %cst_104 [0] : vector<8x384xf32> to vector<384xf32>
    %267 = vector.shape_cast %266 : vector<384xf32> to vector<1x384xf32>
    %cst_105 = arith.constant 8.000000e+00 : f32
    %268 = vector.broadcast %cst_105 : f32 to vector<1x384xf32>
    %269 = arith.divf %267, %268 : vector<1x384xf32>
    %270 = arith.mulf %265, %265 : vector<8x384xf32>
    %cst_106 = arith.constant dense<0.000000e+00> : vector<384xf32>
    %271 = vector.multi_reduction <add>, %270, %cst_106 [0] : vector<8x384xf32> to vector<384xf32>
    %272 = vector.shape_cast %271 : vector<384xf32> to vector<1x384xf32>
    %cst_107 = arith.constant 8.000000e+00 : f32
    %273 = vector.broadcast %cst_107 : f32 to vector<1x384xf32>
    %274 = arith.divf %272, %273 : vector<1x384xf32>
    %275 = arith.mulf %269, %269 : vector<1x384xf32>
    %276 = arith.subf %274, %275 : vector<1x384xf32>
    %cst_108 = arith.constant 9.99999974E-6 : f32
    %277 = vector.broadcast %cst_108 : f32 to vector<1x384xf32>
    %278 = arith.addf %276, %277 : vector<1x384xf32>
    %279 = math.rsqrt %278 : vector<1x384xf32>
    %280 = vector.broadcast %269 : vector<1x384xf32> to vector<8x384xf32>
    %281 = arith.subf %265, %280 : vector<8x384xf32>
    %282 = arith.mulf %279, %263 : vector<1x384xf32>
    %283 = vector.broadcast %282 : vector<1x384xf32> to vector<8x384xf32>
    %284 = arith.mulf %281, %283 : vector<8x384xf32>
    %285 = vector.broadcast %264 : vector<1x384xf32> to vector<8x384xf32>
    %286 = arith.addf %284, %285 : vector<8x384xf32>
    %cst_109 = arith.constant 2.057000e+01 : f32
    %287 = vector.broadcast %cst_109 : f32 to vector<8x384xf32>
    %288 = arith.mulf %286, %287 : vector<8x384xf32>
    %cst_110 = arith.constant -2.288000e+01 : f32
    %289 = vector.broadcast %cst_110 : f32 to vector<8x384xf32>
    %290 = arith.addf %288, %289 : vector<8x384xf32>
    %c0_111 = arith.constant 0 : index
    %c0_112 = arith.constant 0 : index
    %291 = vector.load %arg12[%c0_111, %c0_112] : memref<8x384xf32, #tpu.memory_space<vmem>>, vector<8x384xf32>
    tpu.vector_store %arg12[%c0_111, %c0_112], %290 {strides = array<i32>} : memref<8x384xf32, #tpu.memory_space<vmem>>, vector<8x384xf32>,
    return
  }
}

</mosaic_0001>

<llo_original>
// kernel: autoencoder_forward.1
$region0: #{autoencoder_forward.1}
  #allocation0 [shape = 'u32[]', space=smem, size = 0x4, offset = 0x4, fixed_abs, tag = 'smem constant byte address 0x4 - core index']
  #allocation1 [shape = 'u32[144,128]{1,0:T(1,128)}', space=vmem, size = 0x12000, scoped, tag = 'internal scratch']
  %s0 = inlined_call_operand.vmem [shape: f32[8,384], index: 0, kind: input, shape index: {}]
  %s1 = inlined_call_operand.vmem [shape: f32[10,2,384], index: 1, kind: input, shape index: {}]
  %s2 = inlined_call_operand.vmem [shape: f32[384,128], index: 2, kind: input, shape index: {}]
  %s3 = inlined_call_operand.vmem [shape: f32[128,64], index: 3, kind: input, shape index: {}]
  %s4 = inlined_call_operand.vmem [shape: f32[64,32], index: 4, kind: input, shape index: {}]
  %s5 = inlined_call_operand.vmem [shape: f32[32,16], index: 5, kind: input, shape index: {}]
  %s6 = inlined_call_operand.vmem [shape: f32[16,8], index: 6, kind: input, shape index: {}]
  %s7 = inlined_call_operand.vmem [shape: f32[8,16], index: 7, kind: input, shape index: {}]
  %s8 = inlined_call_operand.vmem [shape: f32[16,32], index: 8, kind: input, shape index: {}]
  %s9 = inlined_call_operand.vmem [shape: f32[32,64], index: 9, kind: input, shape index: {}]
  %s10 = inlined_call_operand.vmem [shape: f32[64,128], index: 10, kind: input, shape index: {}]
  %s11 = inlined_call_operand.vmem [shape: f32[128,384], index: 11, kind: input, shape index: {}]
  %s12 = inlined_call_operand.hbm [shape: f32[8,384], index: 12, kind: output, shape index: {}]
  %s13 = sld [smem:[#allocation0]]
  $region58: #{autoencoder_forward.1} parent=0
    _
  %s15 = ssub.s32 1, %s13
  %s16 = scalar_select 0, %s15, %s13
  $region1: #{autoencoder_forward.1} parent=0
    #allocation2 [shape = 'u8[12288]{0}', space=vmem, size = 0x3000, scoped, tag = 'output window, operand 0, single buffered']
    #allocation3 [shape = 's32[1]{0}', space=sflag, size = 0x4, scoped, tag = 'scoped memory for autoencoder_forward.1']
    %17 = vsyncpa [#allocation3], 0
    // Predicated region
    $region2: #{autoencoder_forward.1} parent=1 // pred_check
      _
    $region3: #{autoencoder_forward.1} parent=1 // pred_check_branch
      %19 = sbr.rel (0) target = $region5
    $region4: #{autoencoder_forward.1} parent=1 // pred_region
      _
    $region5: #{autoencoder_forward.1} parent=1 // pred_fallthru
      _
    // Predicated region
    $region6: #{autoencoder_forward.1} parent=1 // pred_check
      _
    $region7: #{autoencoder_forward.1} parent=1 // pred_check_branch
      %21 = sbr.rel (0) target = $region9
    $region8: #{autoencoder_forward.1} parent=1 // pred_region
      _
    $region9: #{autoencoder_forward.1} parent=1 // pred_fallthru
      _
    // Predicated region
    $region10: #{autoencoder_forward.1} parent=1 // pred_check
      _
    $region11: #{autoencoder_forward.1} parent=1 // pred_check_branch
      %23 = sbr.rel (0) target = $region13
    $region12: #{autoencoder_forward.1} parent=1 // pred_region
      _
    $region13: #{autoencoder_forward.1} parent=1 // pred_fallthru
      _
    // Predicated region
    $region14: #{autoencoder_forward.1} parent=1 // pred_check
      _
    $region15: #{autoencoder_forward.1} parent=1 // pred_check_branch
      %25 = sbr.rel (0) target = $region17
    $region16: #{autoencoder_forward.1} parent=1 // pred_region
      _
    $region17: #{autoencoder_forward.1} parent=1 // pred_fallthru
      _
    // Predicated region
    $region18: #{autoencoder_forward.1} parent=1 // pred_check
      _
    $region19: #{autoencoder_forward.1} parent=1 // pred_check_branch
      %27 = sbr.rel (0) target = $region21
    $region20: #{autoencoder_forward.1} parent=1 // pred_region
      _
    $region21: #{autoencoder_forward.1} parent=1 // pred_fallthru
      _
    // Predicated region
    $region22: #{autoencoder_forward.1} parent=1 // pred_check
      _
    $region23: #{autoencoder_forward.1} parent=1 // pred_check_branch
      %29 = sbr.rel (0) target = $region25
    $region24: #{autoencoder_forward.1} parent=1 // pred_region
      _
    $region25: #{autoencoder_forward.1} parent=1 // pred_fallthru
      _
    // Predicated region
    $region26: #{autoencoder_forward.1} parent=1 // pred_check
      _
    $region27: #{autoencoder_forward.1} parent=1 // pred_check_branch
      %31 = sbr.rel (0) target = $region29
    $region28: #{autoencoder_forward.1} parent=1 // pred_region
      _
    $region29: #{autoencoder_forward.1} parent=1 // pred_fallthru
      _
    // Predicated region
    $region30: #{autoencoder_forward.1} parent=1 // pred_check
      _
    $region31: #{autoencoder_forward.1} parent=1 // pred_check_branch
      %33 = sbr.rel (0) target = $region33
    $region32: #{autoencoder_forward.1} parent=1 // pred_region
      _
    $region33: #{autoencoder_forward.1} parent=1 // pred_fallthru
      _
    // Predicated region
    $region34: #{autoencoder_forward.1} parent=1 // pred_check
      _
    $region35: #{autoencoder_forward.1} parent=1 // pred_check_branch
      %35 = sbr.rel (0) target = $region37
    $region36: #{autoencoder_forward.1} parent=1 // pred_region
      _
    $region37: #{autoencoder_forward.1} parent=1 // pred_fallthru
      _
    // Predicated region
    $region38: #{autoencoder_forward.1} parent=1 // pred_check
      _
    $region39: #{autoencoder_forward.1} parent=1 // pred_check_branch
      %37 = sbr.rel (0) target = $region41
    $region40: #{autoencoder_forward.1} parent=1 // pred_region
      _
    $region41: #{autoencoder_forward.1} parent=1 // pred_fallthru
      _
    // Predicated region
    $region42: #{autoencoder_forward.1} parent=1 // pred_check
      _
    $region43: #{autoencoder_forward.1} parent=1 // pred_check_branch
      %39 = sbr.rel (0) target = $region45
    $region44: #{autoencoder_forward.1} parent=1 // pred_region
      _
    $region45: #{autoencoder_forward.1} parent=1 // pred_fallthru
      _
    // Predicated region
    $region46: #{autoencoder_forward.1} parent=1 // pred_check
      _
    $region47: #{autoencoder_forward.1} parent=1 // pred_check_branch
      %41 = sbr.rel (0) target = $region49
    $region48: #{autoencoder_forward.1} parent=1 // pred_region
      _
    $region49: #{autoencoder_forward.1} parent=1 // pred_fallthru
      _
    %v42 = vld [vmem:[%s0] sm:$0xff]
    %v43 = vld [vmem:[%s0 + $0x8] sm:$0xff]
    %v44 = vld [vmem:[%s0 + $0x10] sm:$0xff]
    %v45 = vsub.f32 %v42, -22.88
    %v46 = vsub.f32 %v43, -22.88
    %v47 = vsub.f32 %v44, -22.88
    %v48 = vmul.f32 %v45, 0.048614487
    %v49 = vmul.f32 %v46, 0.048614487
    %v50 = vmul.f32 %v47, 0.048614487
    %v51 = vld [vmem:[%s2] sm:$0xff]
    %v52 = vld [vmem:[%s2 + $0x8] sm:$0xff]
    %v53 = vld [vmem:[%s2 + $0x10] sm:$0xff]
    %v54 = vld [vmem:[%s2 + $0x18] sm:$0xff]
    %v55 = vld [vmem:[%s2 + $0x20] sm:$0xff]
    %v56 = vld [vmem:[%s2 + $0x28] sm:$0xff]
    %v57 = vld [vmem:[%s2 + $0x30] sm:$0xff]
    %v58 = vld [vmem:[%s2 + $0x38] sm:$0xff]
    %v59 = vld [vmem:[%s2 + $0x40] sm:$0xff]
    %v60 = vld [vmem:[%s2 + $0x48] sm:$0xff]
    %v61 = vld [vmem:[%s2 + $0x50] sm:$0xff]
    %v62 = vld [vmem:[%s2 + $0x58] sm:$0xff]
    %v63 = vld [vmem:[%s2 + $0x60] sm:$0xff]
    %v64 = vld [vmem:[%s2 + $0x68] sm:$0xff]
    %v65 = vld [vmem:[%s2 + $0x70] sm:$0xff]
    %v66 = vld [vmem:[%s2 + $0x78] sm:$0xff]
    %v67 = vld [vmem:[%s2 + $0x80] sm:$0xff]
    %v68 = vld [vmem:[%s2 + $0x88] sm:$0xff]
    %v69 = vld [vmem:[%s2 + $0x90] sm:$0xff]
    %v70 = vld [vmem:[%s2 + $0x98] sm:$0xff]
    %v71 = vld [vmem:[%s2 + $0xa0] sm:$0xff]
    %v72 = vld [vmem:[%s2 + $0xa8] sm:$0xff]
    %v73 = vld [vmem:[%s2 + $0xb0] sm:$0xff]
    %v74 = vld [vmem:[%s2 + $0xb8] sm:$0xff]
    %v75 = vld [vmem:[%s2 + $0xc0] sm:$0xff]
    %v76 = vld [vmem:[%s2 + $0xc8] sm:$0xff]
    %v77 = vld [vmem:[%s2 + $0xd0] sm:$0xff]
    %v78 = vld [vmem:[%s2 + $0xd8] sm:$0xff]
    %v79 = vld [vmem:[%s2 + $0xe0] sm:$0xff]
    %v80 = vld [vmem:[%s2 + $0xe8] sm:$0xff]
    %v81 = vld [vmem:[%s2 + $0xf0] sm:$0xff]
    %v82 = vld [vmem:[%s2 + $0xf8] sm:$0xff]
    %v83 = vld [vmem:[%s2 + $0x100] sm:$0xff]
    %v84 = vld [vmem:[%s2 + $0x108] sm:$0xff]
    %v85 = vld [vmem:[%s2 + $0x110] sm:$0xff]
    %v86 = vld [vmem:[%s2 + $0x118] sm:$0xff]
    %v87 = vld [vmem:[%s2 + $0x120] sm:$0xff]
    %v88 = vld [vmem:[%s2 + $0x128] sm:$0xff]
    %v89 = vld [vmem:[%s2 + $0x130] sm:$0xff]
    %v90 = vld [vmem:[%s2 + $0x138] sm:$0xff]
    %v91 = vld [vmem:[%s2 + $0x140] sm:$0xff]
    %v92 = vld [vmem:[%s2 + $0x148] sm:$0xff]
    %v93 = vld [vmem:[%s2 + $0x150] sm:$0xff]
    %v94 = vld [vmem:[%s2 + $0x158] sm:$0xff]
    %v95 = vld [vmem:[%s2 + $0x160] sm:$0xff]
    %v96 = vld [vmem:[%s2 + $0x168] sm:$0xff]
    %v97 = vld [vmem:[%s2 + $0x170] sm:$0xff]
    %v98 = vld [vmem:[%s2 + $0x178] sm:$0xff]
    %v99 = vld [vmem:[%s1] sm:$0x3f]
    %100 = vmatprep.subr.mxu0 0.0
    %101 = vmatpush1.msra.mxu0 %v66
    %102 = vmatprep.subr.mxu0 0.0
    %103 = vmatpush1.msra.mxu0 %v65
    %104 = vmatprep.subr.mxu0 0.0
    %105 = vmatpush1.msra.mxu0 %v64
    %106 = vmatprep.subr.mxu0 0.0
    %107 = vmatpush1.msra.mxu0 %v63
    %108 = vmatprep.subr.mxu0 0.0
    %109 = vmatpush1.msra.mxu0 %v62
    %110 = vmatprep.subr.mxu0 0.0
    %111 = vmatpush1.msra.mxu0 %v61
    %112 = vmatprep.subr.mxu0 0.0
    %113 = vmatpush1.msra.mxu0 %v60
    %114 = vmatprep.subr.mxu0 0.0
    %115 = vmatpush1.msra.mxu0 %v59
    %116 = vmatprep.subr.mxu0 0.0
    %117 = vmatpush1.msra.mxu0 %v58
    %118 = vmatprep.subr.mxu0 0.0
    %119 = vmatpush1.msra.mxu0 %v57
    %120 = vmatprep.subr.mxu0 0.0
    %121 = vmatpush1.msra.mxu0 %v56
    %122 = vmatprep.subr.mxu0 0.0
    %123 = vmatpush1.msra.mxu0 %v55
    %124 = vmatprep.subr.mxu0 0.0
    %125 = vmatpush1.msra.mxu0 %v54
    %126 = vmatprep.subr.mxu0 0.0
    %127 = vmatpush1.msra.mxu0 %v53
    %128 = vmatprep.subr.mxu0 0.0
    %129 = vmatpush1.msra.mxu0 %v52
    %130 = vmatprep.subr.mxu0 0.0
    %131 = vmatpush1.msra.mxu0 %v51
    %132 = vmatprep.subr.mxu0 0.0
    %133 = vmatpush2.msra.mxu0 %v82
    %134 = vmatprep.subr.mxu0 0.0
    %135 = vmatpush2.msra.mxu0 %v81
    %136 = vmatprep.subr.mxu0 0.0
    %137 = vmatpush2.msra.mxu0 %v80
    %138 = vmatprep.subr.mxu0 0.0
    %139 = vmatpush2.msra.mxu0 %v79
    %140 = vmatprep.subr.mxu0 0.0
    %141 = vmatpush2.msra.mxu0 %v78
    %142 = vmatprep.subr.mxu0 0.0
    %143 = vmatpush2.msra.mxu0 %v77
    %144 = vmatprep.subr.mxu0 0.0
    %145 = vmatpush2.msra.mxu0 %v76
    %146 = vmatprep.subr.mxu0 0.0
    %147 = vmatpush2.msra.mxu0 %v75
    %148 = vmatprep.subr.mxu0 0.0
    %149 = vmatpush2.msra.mxu0 %v74
    %150 = vmatprep.subr.mxu0 0.0
    %151 = vmatpush2.msra.mxu0 %v73
    %152 = vmatprep.subr.mxu0 0.0
    %153 = vmatpush2.msra.mxu0 %v72
    %154 = vmatprep.subr.mxu0 0.0
    %155 = vmatpush2.msra.mxu0 %v71
    %156 = vmatprep.subr.mxu0 0.0
    %157 = vmatpush2.msra.mxu0 %v70
    %158 = vmatprep.subr.mxu0 0.0
    %159 = vmatpush2.msra.mxu0 %v69
    %160 = vmatprep.subr.mxu0 0.0
    %161 = vmatpush2.msra.mxu0 %v68
    %162 = vmatprep.subr.mxu0 0.0
    %163 = vmatpush2.msra.mxu0 %v67
    %164 = vmatprep.mubr.f32.mxu0 %v49
    %165 = vmatmul.mubr.f32.gmra.mxu0 %v48
    %v166 = vpop.f32.mrf.mxu0
    %v167 = vadd.f32 0.0, %v166
    %v168 = vpop.f32.mrf.mxu0
    %169 = vdwg.mxu0
    %170 = vmatprep.subr.mxu0 0.0
    %171 = vmatpush1.msra.mxu0 %v98
    %172 = vmatprep.subr.mxu0 0.0
    %173 = vmatpush1.msra.mxu0 %v97
    %174 = vmatprep.subr.mxu0 0.0
    %175 = vmatpush1.msra.mxu0 %v96
    %176 = vmatprep.subr.mxu0 0.0
    %177 = vmatpush1.msra.mxu0 %v95
    %178 = vmatprep.subr.mxu0 0.0
    %179 = vmatpush1.msra.mxu0 %v94
    %180 = vmatprep.subr.mxu0 0.0
    %181 = vmatpush1.msra.mxu0 %v93
    %182 = vmatprep.subr.mxu0 0.0
    %183 = vmatpush1.msra.mxu0 %v92
    %184 = vmatprep.subr.mxu0 0.0
    %185 = vmatpush1.msra.mxu0 %v91
    %186 = vmatprep.subr.mxu0 0.0
    %187 = vmatpush1.msra.mxu0 %v90
    %188 = vmatprep.subr.mxu0 0.0
    %189 = vmatpush1.msra.mxu0 %v89
    %190 = vmatprep.subr.mxu0 0.0
    %191 = vmatpush1.msra.mxu0 %v88
    %192 = vmatprep.subr.mxu0 0.0
    %193 = vmatpush1.msra.mxu0 %v87
    %194 = vmatprep.subr.mxu0 0.0
    %195 = vmatpush1.msra.mxu0 %v86
    %196 = vmatprep.subr.mxu0 0.0
    %197 = vmatpush1.msra.mxu0 %v85
    %198 = vmatprep.subr.mxu0 0.0
    %199 = vmatpush1.msra.mxu0 %v84
    %200 = vmatprep.subr.mxu0 0.0
    %201 = vmatpush1.msra.mxu0 %v83
    %202 = vmatprep.subr.mxu0 0.0
    %203 = vmatpush2.msra.mxu0 0.0
    %204 = vmatprep.subr.mxu0 0.0
    %205 = vmatpush2.msra.mxu0 0.0
    %206 = vmatprep.subr.mxu0 0.0
    %207 = vmatpush2.msra.mxu0 0.0
    %208 = vmatprep.subr.mxu0 0.0
    %209 = vmatpush2.msra.mxu0 0.0
    %210 = vmatprep.subr.mxu0 0.0
    %211 = vmatpush2.msra.mxu0 0.0
    %212 = vmatprep.subr.mxu0 0.0
    %213 = vmatpush2.msra.mxu0 0.0
    %214 = vmatprep.subr.mxu0 0.0
    %215 = vmatpush2.msra.mxu0 0.0
    %216 = vmatprep.subr.mxu0 0.0
    %217 = vmatpush2.msra.mxu0 0.0
    %218 = vmatprep.subr.mxu0 0.0
    %219 = vmatpush2.msra.mxu0 0.0
    %220 = vmatprep.subr.mxu0 0.0
    %221 = vmatpush2.msra.mxu0 0.0
    %222 = vmatprep.subr.mxu0 0.0
    %223 = vmatpush2.msra.mxu0 0.0
    %224 = vmatprep.subr.mxu0 0.0
    %225 = vmatpush2.msra.mxu0 0.0
    %226 = vmatprep.subr.mxu0 0.0
    %227 = vmatpush2.msra.mxu0 0.0
    %228 = vmatprep.subr.mxu0 0.0
    %229 = vmatpush2.msra.mxu0 0.0
    %230 = vmatprep.subr.mxu0 0.0
    %231 = vmatpush2.msra.mxu0 0.0
    %232 = vmatprep.subr.mxu0 0.0
    %233 = vmatpush2.msra.mxu0 0.0
    %234 = vmatprep.mubr.f32.mxu0 0.0
    %235 = vmatmul.mubr.f32.gmra.mxu0 %v50
    %v236 = vpop.f32.mrf.mxu0
    %v237 = vadd.f32 %v167, %v236
    %v238 = vpop.f32.mrf.mxu0
    %239 = vdwg.mxu0
    %v240 = vrot.slane %v237, 4
    %v241 = vadd.f32 %v237, %v240
    %v242 = vrot.slane %v241, 2
    %v243 = vadd.f32 %v241, %v242
    %v244 = vrot.slane %v243, 1
    %v245 = vadd.f32 %v243, %v244
    %v246 = vrcp.pop 8.0
    %v247 = vmul.f32 %v245, %v246
    %v248 = vmul.f32 %v237, %v237
    %v249 = vrot.slane %v248, 4
    %v250 = vadd.f32 %v248, %v249
    %v251 = vrot.slane %v250, 2
    %v252 = vadd.f32 %v250, %v251
    %v253 = vrot.slane %v252, 1
    %v254 = vadd.f32 %v252, %v253
    %v255 = vmul.f32 %v254, %v246
    %v256 = vmul.f32 %v247, %v247
    %v257 = vsub.f32 %v255, %v256
    %v258 = vadd.f32 %v257, 1e-05
    %v259 = vrsqrt.pop %v258
    %v260 = vsub.f32 %v237, %v247
    %v261 = vmul.f32 %v259, %v99
    %v262 = vlaneseq
    %v263 = vshrl.u32 %v262, 7
    %v264 = vsub.s32 0, %v263
    %v265 = vrot.slane %v261, %v264
    %v266 = vmul.f32 %v260, %v265
    %v267 = vlaneseq
    %v268 = vshrl.u32 %v267, 7
    %v269 = vsub.s32 1, %v268
    %v270 = vrot.slane %v99, %v269
    %v271 = vadd.f32 %v266, %v270
    %v272 = vmax.f32 %v271, 0.0
    %v273 = vld [vmem:[%s3] sm:$0xff]
    %v274 = vld [vmem:[%s3 + $0x8] sm:$0xff]
    %v275 = vld [vmem:[%s3 + $0x10] sm:$0xff]
    %v276 = vld [vmem:[%s3 + $0x18] sm:$0xff]
    %v277 = vld [vmem:[%s3 + $0x20] sm:$0xff]
    %v278 = vld [vmem:[%s3 + $0x28] sm:$0xff]
    %v279 = vld [vmem:[%s3 + $0x30] sm:$0xff]
    %v280 = vld [vmem:[%s3 + $0x38] sm:$0xff]
    %v281 = vld [vmem:[%s3 + $0x40] sm:$0xff]
    %v282 = vld [vmem:[%s3 + $0x48] sm:$0xff]
    %v283 = vld [vmem:[%s3 + $0x50] sm:$0xff]
    %v284 = vld [vmem:[%s3 + $0x58] sm:$0xff]
    %v285 = vld [vmem:[%s3 + $0x60] sm:$0xff]
    %v286 = vld [vmem:[%s3 + $0x68] sm:$0xff]
    %v287 = vld [vmem:[%s3 + $0x70] sm:$0xff]
    %v288 = vld [vmem:[%s3 + $0x78] sm:$0xff]
    %s289 = scalar_lea.vmem %s1, 6
    %v290 = vld [vmem:[%s289] sm:$0x3f]
    %291 = vmatprep.subr.mxu0 0.0
    %292 = vmatpush1.msra.mxu0 %v288
    %293 = vmatprep.subr.mxu0 0.0
    %294 = vmatpush1.msra.mxu0 %v287
    %295 = vmatprep.subr.mxu0 0.0
    %296 = vmatpush1.msra.mxu0 %v286
    %297 = vmatprep.subr.mxu0 0.0
    %298 = vmatpush1.msra.mxu0 %v285
    %299 = vmatprep.subr.mxu0 0.0
    %300 = vmatpush1.msra.mxu0 %v284
    %301 = vmatprep.subr.mxu0 0.0
    %302 = vmatpush1.msra.mxu0 %v283
    %303 = vmatprep.subr.mxu0 0.0
    %304 = vmatpush1.msra.mxu0 %v282
    %305 = vmatprep.subr.mxu0 0.0
    %306 = vmatpush1.msra.mxu0 %v281
    %307 = vmatprep.subr.mxu0 0.0
    %308 = vmatpush1.msra.mxu0 %v280
    %309 = vmatprep.subr.mxu0 0.0
    %310 = vmatpush1.msra.mxu0 %v279
    %311 = vmatprep.subr.mxu0 0.0
    %312 = vmatpush1.msra.mxu0 %v278
    %313 = vmatprep.subr.mxu0 0.0
    %314 = vmatpush1.msra.mxu0 %v277
    %315 = vmatprep.subr.mxu0 0.0
    %316 = vmatpush1.msra.mxu0 %v276
    %317 = vmatprep.subr.mxu0 0.0
    %318 = vmatpush1.msra.mxu0 %v275
    %319 = vmatprep.subr.mxu0 0.0
    %320 = vmatpush1.msra.mxu0 %v274
    %321 = vmatprep.subr.mxu0 0.0
    %322 = vmatpush1.msra.mxu0 %v273
    %323 = vmatprep.subr.mxu0 0.0
    %324 = vmatpush2.msra.mxu0 0.0
    %325 = vmatprep.subr.mxu0 0.0
    %326 = vmatpush2.msra.mxu0 0.0
    %327 = vmatprep.subr.mxu0 0.0
    %328 = vmatpush2.msra.mxu0 0.0
    %329 = vmatprep.subr.mxu0 0.0
    %330 = vmatpush2.msra.mxu0 0.0
    %331 = vmatprep.subr.mxu0 0.0
    %332 = vmatpush2.msra.mxu0 0.0
    %333 = vmatprep.subr.mxu0 0.0
    %334 = vmatpush2.msra.mxu0 0.0
    %335 = vmatprep.subr.mxu0 0.0
    %336 = vmatpush2.msra.mxu0 0.0
    %337 = vmatprep.subr.mxu0 0.0
    %338 = vmatpush2.msra.mxu0 0.0
    %339 = vmatprep.subr.mxu0 0.0
    %340 = vmatpush2.msra.mxu0 0.0
    %341 = vmatprep.subr.mxu0 0.0
    %342 = vmatpush2.msra.mxu0 0.0
    %343 = vmatprep.subr.mxu0 0.0
    %344 = vmatpush2.msra.mxu0 0.0
    %345 = vmatprep.subr.mxu0 0.0
    %346 = vmatpush2.msra.mxu0 0.0
    %347 = vmatprep.subr.mxu0 0.0
    %348 = vmatpush2.msra.mxu0 0.0
    %349 = vmatprep.subr.mxu0 0.0
    %350 = vmatpush2.msra.mxu0 0.0
    %351 = vmatprep.subr.mxu0 0.0
    %352 = vmatpush2.msra.mxu0 0.0
    %353 = vmatprep.subr.mxu0 0.0
    %354 = vmatpush2.msra.mxu0 0.0
    %355 = vmatprep.mubr.f32.mxu0 0.0
    %356 = vmatmul.mubr.f32.gmra.mxu0 %v272
    %v357 = vpop.f32.mrf.mxu0
    %v358 = vadd.f32 0.0, %v357
    %v359 = vpop.f32.mrf.mxu0
    %360 = vdwg.mxu0
    %vm361 = vcmask 523264
    %v362 = vsel %vm361, %v358, 0.0
    %v363 = vrot.slane %v362, 4
    %v364 = vadd.f32 %v362, %v363
    %v365 = vrot.slane %v364, 2
    %v366 = vadd.f32 %v364, %v365
    %v367 = vrot.slane %v366, 1
    %v368 = vadd.f32 %v366, %v367
    %v369 = vmul.f32 %v368, %v246
    %v370 = vmul.f32 %v358, %v358
    %v371 = vsel %vm361, %v370, 0.0
    %v372 = vrot.slane %v371, 4
    %v373 = vadd.f32 %v371, %v372
    %v374 = vrot.slane %v373, 2
    %v375 = vadd.f32 %v373, %v374
    %v376 = vrot.slane %v375, 1
    %v377 = vadd.f32 %v375, %v376
    %v378 = vmul.f32 %v377, %v246
    %v379 = vmul.f32 %v369, %v369
    %v380 = vsub.f32 %v378, %v379
    %v381 = vadd.f32 %v380, 1e-05
    %v382 = vrsqrt.pop %v381
    %v383 = vsub.f32 %v358, %v369
    %v384 = vmul.f32 %v382, %v290
    %v385 = vlaneseq
    %v386 = vshrl.u32 %v385, 7
    %v387 = vsub.s32 0, %v386
    %v388 = vrot.slane %v384, %v387
    %v389 = vmul.f32 %v383, %v388
    %v390 = vlaneseq
    %v391 = vshrl.u32 %v390, 7
    %v392 = vsub.s32 1, %v391
    %v393 = vrot.slane %v290, %v392
    %v394 = vadd.f32 %v389, %v393
    %v395 = vmax.f32 %v394, 0.0
    %v396 = vld [vmem:[%s4] sm:$0xff]
    %v397 = vld [vmem:[%s4 + $0x8] sm:$0xff]
    %v398 = vld [vmem:[%s4 + $0x10] sm:$0xff]
    %v399 = vld [vmem:[%s4 + $0x18] sm:$0xff]
    %v400 = vld [vmem:[%s4 + $0x20] sm:$0xff]
    %v401 = vld [vmem:[%s4 + $0x28] sm:$0xff]
    %v402 = vld [vmem:[%s4 + $0x30] sm:$0xff]
    %v403 = vld [vmem:[%s4 + $0x38] sm:$0xff]
    %s404 = scalar_lea.vmem %s1, 12
    %v405 = vld [vmem:[%s404] sm:$0x3f]
    %v407 = vsel %vm361, %v395, 0
    %409 = vmatprep.subr.mxu0 0.0
    %410 = vmatpush1.msra.mxu0 0.0
    %411 = vmatprep.subr.mxu0 0.0
    %412 = vmatpush1.msra.mxu0 0.0
    %413 = vmatprep.subr.mxu0 0.0
    %414 = vmatpush1.msra.mxu0 0.0
    %415 = vmatprep.subr.mxu0 0.0
    %416 = vmatpush1.msra.mxu0 0.0
    %417 = vmatprep.subr.mxu0 0.0
    %418 = vmatpush1.msra.mxu0 0.0
    %419 = vmatprep.subr.mxu0 0.0
    %420 = vmatpush1.msra.mxu0 0.0
    %421 = vmatprep.subr.mxu0 0.0
    %422 = vmatpush1.msra.mxu0 0.0
    %423 = vmatprep.subr.mxu0 0.0
    %424 = vmatpush1.msra.mxu0 0.0
    %425 = vmatprep.subr.mxu0 0.0
    %426 = vmatpush1.msra.mxu0 %v403
    %427 = vmatprep.subr.mxu0 0.0
    %428 = vmatpush1.msra.mxu0 %v402
    %429 = vmatprep.subr.mxu0 0.0
    %430 = vmatpush1.msra.mxu0 %v401
    %431 = vmatprep.subr.mxu0 0.0
    %432 = vmatpush1.msra.mxu0 %v400
    %433 = vmatprep.subr.mxu0 0.0
    %434 = vmatpush1.msra.mxu0 %v399
    %435 = vmatprep.subr.mxu0 0.0
    %436 = vmatpush1.msra.mxu0 %v398
    %437 = vmatprep.subr.mxu0 0.0
    %438 = vmatpush1.msra.mxu0 %v397
    %439 = vmatprep.subr.mxu0 0.0
    %440 = vmatpush1.msra.mxu0 %v396
    %441 = vmatprep.subr.mxu0 0.0
    %442 = vmatpush2.msra.mxu0 0.0
    %443 = vmatprep.subr.mxu0 0.0
    %444 = vmatpush2.msra.mxu0 0.0
    %445 = vmatprep.subr.mxu0 0.0
    %446 = vmatpush2.msra.mxu0 0.0
    %447 = vmatprep.subr.mxu0 0.0
    %448 = vmatpush2.msra.mxu0 0.0
    %449 = vmatprep.subr.mxu0 0.0
    %450 = vmatpush2.msra.mxu0 0.0
    %451 = vmatprep.subr.mxu0 0.0
    %452 = vmatpush2.msra.mxu0 0.0
    %453 = vmatprep.subr.mxu0 0.0
    %454 = vmatpush2.msra.mxu0 0.0
    %455 = vmatprep.subr.mxu0 0.0
    %456 = vmatpush2.msra.mxu0 0.0
    %457 = vmatprep.subr.mxu0 0.0
    %458 = vmatpush2.msra.mxu0 0.0
    %459 = vmatprep.subr.mxu0 0.0
    %460 = vmatpush2.msra.mxu0 0.0
    %461 = vmatprep.subr.mxu0 0.0
    %462 = vmatpush2.msra.mxu0 0.0
    %463 = vmatprep.subr.mxu0 0.0
    %464 = vmatpush2.msra.mxu0 0.0
    %465 = vmatprep.subr.mxu0 0.0
    %466 = vmatpush2.msra.mxu0 0.0
    %467 = vmatprep.subr.mxu0 0.0
    %468 = vmatpush2.msra.mxu0 0.0
    %469 = vmatprep.subr.mxu0 0.0
    %470 = vmatpush2.msra.mxu0 0.0
    %471 = vmatprep.subr.mxu0 0.0
    %472 = vmatpush2.msra.mxu0 0.0
    %473 = vmatprep.mubr.f32.mxu0 0.0
    %474 = vmatmul.mubr.f32.gmra.mxu0 %v407
    %v475 = vpop.f32.mrf.mxu0
    %v476 = vadd.f32 0.0, %v475
    %v477 = vpop.f32.mrf.mxu0
    %478 = vdwg.mxu0
    %vm479 = vcmask 261120
    %v480 = vsel %vm479, %v476, 0.0
    %v481 = vrot.slane %v480, 4
    %v482 = vadd.f32 %v480, %v481
    %v483 = vrot.slane %v482, 2
    %v484 = vadd.f32 %v482, %v483
    %v485 = vrot.slane %v484, 1
    %v486 = vadd.f32 %v484, %v485
    %v487 = vmul.f32 %v486, %v246
    %v488 = vmul.f32 %v476, %v476
    %v489 = vsel %vm479, %v488, 0.0
    %v490 = vrot.slane %v489, 4
    %v491 = vadd.f32 %v489, %v490
    %v492 = vrot.slane %v491, 2
    %v493 = vadd.f32 %v491, %v492
    %v494 = vrot.slane %v493, 1
    %v495 = vadd.f32 %v493, %v494
    %v496 = vmul.f32 %v495, %v246
    %v497 = vmul.f32 %v487, %v487
    %v498 = vsub.f32 %v496, %v497
    %v499 = vadd.f32 %v498, 1e-05
    %v500 = vrsqrt.pop %v499
    %v501 = vsub.f32 %v476, %v487
    %v502 = vmul.f32 %v500, %v405
    %v503 = vlaneseq
    %v504 = vshrl.u32 %v503, 7
    %v505 = vsub.s32 0, %v504
    %v506 = vrot.slane %v502, %v505
    %v507 = vmul.f32 %v501, %v506
    %v508 = vlaneseq
    %v509 = vshrl.u32 %v508, 7
    %v510 = vsub.s32 1, %v509
    %v511 = vrot.slane %v405, %v510
    %v512 = vadd.f32 %v507, %v511
    %v513 = vmax.f32 %v512, 0.0
    %v514 = vld [vmem:[%s5] sm:$0xff]
    %v515 = vld [vmem:[%s5 + $0x8] sm:$0xff]
    %v516 = vld [vmem:[%s5 + $0x10] sm:$0xff]
    %v517 = vld [vmem:[%s5 + $0x18] sm:$0xff]
    %s518 = scalar_lea.vmem %s1, 18
    %v519 = vld [vmem:[%s518] sm:$0x3f]
    %v521 = vsel %vm479, %v513, 0
    %523 = vmatprep.subr.mxu0 0.0
    %524 = vmatpush1.msra.mxu0 0.0
    %525 = vmatprep.subr.mxu0 0.0
    %526 = vmatpush1.msra.mxu0 0.0
    %527 = vmatprep.subr.mxu0 0.0
    %528 = vmatpush1.msra.mxu0 0.0
    %529 = vmatprep.subr.mxu0 0.0
    %530 = vmatpush1.msra.mxu0 0.0
    %531 = vmatprep.subr.mxu0 0.0
    %532 = vmatpush1.msra.mxu0 0.0
    %533 = vmatprep.subr.mxu0 0.0
    %534 = vmatpush1.msra.mxu0 0.0
    %535 = vmatprep.subr.mxu0 0.0
    %536 = vmatpush1.msra.mxu0 0.0
    %537 = vmatprep.subr.mxu0 0.0
    %538 = vmatpush1.msra.mxu0 0.0
    %539 = vmatprep.subr.mxu0 0.0
    %540 = vmatpush1.msra.mxu0 0.0
    %541 = vmatprep.subr.mxu0 0.0
    %542 = vmatpush1.msra.mxu0 0.0
    %543 = vmatprep.subr.mxu0 0.0
    %544 = vmatpush1.msra.mxu0 0.0
    %545 = vmatprep.subr.mxu0 0.0
    %546 = vmatpush1.msra.mxu0 0.0
    %547 = vmatprep.subr.mxu0 0.0
    %548 = vmatpush1.msra.mxu0 %v517
    %549 = vmatprep.subr.mxu0 0.0
    %550 = vmatpush1.msra.mxu0 %v516
    %551 = vmatprep.subr.mxu0 0.0
    %552 = vmatpush1.msra.mxu0 %v515
    %553 = vmatprep.subr.mxu0 0.0
    %554 = vmatpush1.msra.mxu0 %v514
    %555 = vmatprep.subr.mxu0 0.0
    %556 = vmatpush2.msra.mxu0 0.0
    %557 = vmatprep.subr.mxu0 0.0
    %558 = vmatpush2.msra.mxu0 0.0
    %559 = vmatprep.subr.mxu0 0.0
    %560 = vmatpush2.msra.mxu0 0.0
    %561 = vmatprep.subr.mxu0 0.0
    %562 = vmatpush2.msra.mxu0 0.0
    %563 = vmatprep.subr.mxu0 0.0
    %564 = vmatpush2.msra.mxu0 0.0
    %565 = vmatprep.subr.mxu0 0.0
    %566 = vmatpush2.msra.mxu0 0.0
    %567 = vmatprep.subr.mxu0 0.0
    %568 = vmatpush2.msra.mxu0 0.0
    %569 = vmatprep.subr.mxu0 0.0
    %570 = vmatpush2.msra.mxu0 0.0
    %571 = vmatprep.subr.mxu0 0.0
    %572 = vmatpush2.msra.mxu0 0.0
    %573 = vmatprep.subr.mxu0 0.0
    %574 = vmatpush2.msra.mxu0 0.0
    %575 = vmatprep.subr.mxu0 0.0
    %576 = vmatpush2.msra.mxu0 0.0
    %577 = vmatprep.subr.mxu0 0.0
    %578 = vmatpush2.msra.mxu0 0.0
    %579 = vmatprep.subr.mxu0 0.0
    %580 = vmatpush2.msra.mxu0 0.0
    %581 = vmatprep.subr.mxu0 0.0
    %582 = vmatpush2.msra.mxu0 0.0
    %583 = vmatprep.subr.mxu0 0.0
    %584 = vmatpush2.msra.mxu0 0.0
    %585 = vmatprep.subr.mxu0 0.0
    %586 = vmatpush2.msra.mxu0 0.0
    %587 = vmatprep.mubr.f32.mxu0 0.0
    %588 = vmatmul.mubr.f32.gmra.mxu0 %v521
    %v589 = vpop.f32.mrf.mxu0
    %v590 = vadd.f32 0.0, %v589
    %v591 = vpop.f32.mrf.mxu0
    %592 = vdwg.mxu0
    %vm593 = vcmask 130048
    %v594 = vsel %vm593, %v590, 0.0
    %v595 = vrot.slane %v594, 4
    %v596 = vadd.f32 %v594, %v595
    %v597 = vrot.slane %v596, 2
    %v598 = vadd.f32 %v596, %v597
    %v599 = vrot.slane %v598, 1
    %v600 = vadd.f32 %v598, %v599
    %v601 = vmul.f32 %v600, %v246
    %v602 = vmul.f32 %v590, %v590
    %v603 = vsel %vm593, %v602, 0.0
    %v604 = vrot.slane %v603, 4
    %v605 = vadd.f32 %v603, %v604
    %v606 = vrot.slane %v605, 2
    %v607 = vadd.f32 %v605, %v606
    %v608 = vrot.slane %v607, 1
    %v609 = vadd.f32 %v607, %v608
    %v610 = vmul.f32 %v609, %v246
    %v611 = vmul.f32 %v601, %v601
    %v612 = vsub.f32 %v610, %v611
    %v613 = vadd.f32 %v612, 1e-05
    %v614 = vrsqrt.pop %v613
    %v615 = vsub.f32 %v590, %v601
    %v616 = vmul.f32 %v614, %v519
    %v617 = vlaneseq
    %v618 = vshrl.u32 %v617, 7
    %v619 = vsub.s32 0, %v618
    %v620 = vrot.slane %v616, %v619
    %v621 = vmul.f32 %v615, %v620
    %v622 = vlaneseq
    %v623 = vshrl.u32 %v622, 7
    %v624 = vsub.s32 1, %v623
    %v625 = vrot.slane %v519, %v624
    %v626 = vadd.f32 %v621, %v625
    %v627 = vmax.f32 %v626, 0.0
    %v628 = vld [vmem:[%s6] sm:$0xff]
    %v629 = vld [vmem:[%s6 + $0x8] sm:$0xff]
    %s630 = scalar_lea.vmem %s1, 24
    %v631 = vld [vmem:[%s630] sm:$0x3f]
    %v633 = vsel %vm593, %v627, 0
    %635 = vmatprep.subr.mxu0 0.0
    %636 = vmatpush1.msra.mxu0 0.0
    %637 = vmatprep.subr.mxu0 0.0
    %638 = vmatpush1.msra.mxu0 0.0
    %639 = vmatprep.subr.mxu0 0.0
    %640 = vmatpush1.msra.mxu0 0.0
    %641 = vmatprep.subr.mxu0 0.0
    %642 = vmatpush1.msra.mxu0 0.0
    %643 = vmatprep.subr.mxu0 0.0
    %644 = vmatpush1.msra.mxu0 0.0
    %645 = vmatprep.subr.mxu0 0.0
    %646 = vmatpush1.msra.mxu0 0.0
    %647 = vmatprep.subr.mxu0 0.0
    %648 = vmatpush1.msra.mxu0 0.0
    %649 = vmatprep.subr.mxu0 0.0
    %650 = vmatpush1.msra.mxu0 0.0
    %651 = vmatprep.subr.mxu0 0.0
    %652 = vmatpush1.msra.mxu0 0.0
    %653 = vmatprep.subr.mxu0 0.0
    %654 = vmatpush1.msra.mxu0 0.0
    %655 = vmatprep.subr.mxu0 0.0
    %656 = vmatpush1.msra.mxu0 0.0
    %657 = vmatprep.subr.mxu0 0.0
    %658 = vmatpush1.msra.mxu0 0.0
    %659 = vmatprep.subr.mxu0 0.0
    %660 = vmatpush1.msra.mxu0 0.0
    %661 = vmatprep.subr.mxu0 0.0
    %662 = vmatpush1.msra.mxu0 0.0
    %663 = vmatprep.subr.mxu0 0.0
    %664 = vmatpush1.msra.mxu0 %v629
    %665 = vmatprep.subr.mxu0 0.0
    %666 = vmatpush1.msra.mxu0 %v628
    %667 = vmatprep.subr.mxu0 0.0
    %668 = vmatpush2.msra.mxu0 0.0
    %669 = vmatprep.subr.mxu0 0.0
    %670 = vmatpush2.msra.mxu0 0.0
    %671 = vmatprep.subr.mxu0 0.0
    %672 = vmatpush2.msra.mxu0 0.0
    %673 = vmatprep.subr.mxu0 0.0
    %674 = vmatpush2.msra.mxu0 0.0
    %675 = vmatprep.subr.mxu0 0.0
    %676 = vmatpush2.msra.mxu0 0.0
    %677 = vmatprep.subr.mxu0 0.0
    %678 = vmatpush2.msra.mxu0 0.0
    %679 = vmatprep.subr.mxu0 0.0
    %680 = vmatpush2.msra.mxu0 0.0
    %681 = vmatprep.subr.mxu0 0.0
    %682 = vmatpush2.msra.mxu0 0.0
    %683 = vmatprep.subr.mxu0 0.0
    %684 = vmatpush2.msra.mxu0 0.0
    %685 = vmatprep.subr.mxu0 0.0
    %686 = vmatpush2.msra.mxu0 0.0
    %687 = vmatprep.subr.mxu0 0.0
    %688 = vmatpush2.msra.mxu0 0.0
    %689 = vmatprep.subr.mxu0 0.0
    %690 = vmatpush2.msra.mxu0 0.0
    %691 = vmatprep.subr.mxu0 0.0
    %692 = vmatpush2.msra.mxu0 0.0
    %693 = vmatprep.subr.mxu0 0.0
    %694 = vmatpush2.msra.mxu0 0.0
    %695 = vmatprep.subr.mxu0 0.0
    %696 = vmatpush2.msra.mxu0 0.0
    %697 = vmatprep.subr.mxu0 0.0
    %698 = vmatpush2.msra.mxu0 0.0
    %699 = vmatprep.mubr.f32.mxu0 0.0
    %700 = vmatmul.mubr.f32.gmra.mxu0 %v633
    %v701 = vpop.f32.mrf.mxu0
    %v702 = vadd.f32 0.0, %v701
    %v703 = vpop.f32.mrf.mxu0
    %704 = vdwg.mxu0
    %vm705 = vcmask 64512
    %v706 = vsel %vm705, %v702, 0.0
    %v707 = vrot.slane %v706, 4
    %v708 = vadd.f32 %v706, %v707
    %v709 = vrot.slane %v708, 2
    %v710 = vadd.f32 %v708, %v709
    %v711 = vrot.slane %v710, 1
    %v712 = vadd.f32 %v710, %v711
    %v713 = vmul.f32 %v712, %v246
    %v714 = vmul.f32 %v702, %v702
    %v715 = vsel %vm705, %v714, 0.0
    %v716 = vrot.slane %v715, 4
    %v717 = vadd.f32 %v715, %v716
    %v718 = vrot.slane %v717, 2
    %v719 = vadd.f32 %v717, %v718
    %v720 = vrot.slane %v719, 1
    %v721 = vadd.f32 %v719, %v720
    %v722 = vmul.f32 %v721, %v246
    %v723 = vmul.f32 %v713, %v713
    %v724 = vsub.f32 %v722, %v723
    %v725 = vadd.f32 %v724, 1e-05
    %v726 = vrsqrt.pop %v725
    %v727 = vsub.f32 %v702, %v713
    %v728 = vmul.f32 %v726, %v631
    %v729 = vlaneseq
    %v730 = vshrl.u32 %v729, 7
    %v731 = vsub.s32 0, %v730
    %v732 = vrot.slane %v728, %v731
    %v733 = vmul.f32 %v727, %v732
    %v734 = vlaneseq
    %v735 = vshrl.u32 %v734, 7
    %v736 = vsub.s32 1, %v735
    %v737 = vrot.slane %v631, %v736
    %v738 = vadd.f32 %v733, %v737
    %v739 = vmax.f32 %v738, 0.0
    %v740 = vld [vmem:[%s7] sm:$0xff]
    %s741 = scalar_lea.vmem %s1, 30
    %v742 = vld [vmem:[%s741] sm:$0x3f]
    %v744 = vsel %vm705, %v739, 0
    %746 = vmatprep.subr.mxu0 0.0
    %747 = vmatpush1.msra.mxu0 0.0
    %748 = vmatprep.subr.mxu0 0.0
    %749 = vmatpush1.msra.mxu0 0.0
    %750 = vmatprep.subr.mxu0 0.0
    %751 = vmatpush1.msra.mxu0 0.0
    %752 = vmatprep.subr.mxu0 0.0
    %753 = vmatpush1.msra.mxu0 0.0
    %754 = vmatprep.subr.mxu0 0.0
    %755 = vmatpush1.msra.mxu0 0.0
    %756 = vmatprep.subr.mxu0 0.0
    %757 = vmatpush1.msra.mxu0 0.0
    %758 = vmatprep.subr.mxu0 0.0
    %759 = vmatpush1.msra.mxu0 0.0
    %760 = vmatprep.subr.mxu0 0.0
    %761 = vmatpush1.msra.mxu0 0.0
    %762 = vmatprep.subr.mxu0 0.0
    %763 = vmatpush1.msra.mxu0 0.0
    %764 = vmatprep.subr.mxu0 0.0
    %765 = vmatpush1.msra.mxu0 0.0
    %766 = vmatprep.subr.mxu0 0.0
    %767 = vmatpush1.msra.mxu0 0.0
    %768 = vmatprep.subr.mxu0 0.0
    %769 = vmatpush1.msra.mxu0 0.0
    %770 = vmatprep.subr.mxu0 0.0
    %771 = vmatpush1.msra.mxu0 0.0
    %772 = vmatprep.subr.mxu0 0.0
    %773 = vmatpush1.msra.mxu0 0.0
    %774 = vmatprep.subr.mxu0 0.0
    %775 = vmatpush1.msra.mxu0 0.0
    %776 = vmatprep.subr.mxu0 0.0
    %777 = vmatpush1.msra.mxu0 %v740
    %778 = vmatprep.subr.mxu0 0.0
    %779 = vmatpush2.msra.mxu0 0.0
    %780 = vmatprep.subr.mxu0 0.0
    %781 = vmatpush2.msra.mxu0 0.0
    %782 = vmatprep.subr.mxu0 0.0
    %783 = vmatpush2.msra.mxu0 0.0
    %784 = vmatprep.subr.mxu0 0.0
    %785 = vmatpush2.msra.mxu0 0.0
    %786 = vmatprep.subr.mxu0 0.0
    %787 = vmatpush2.msra.mxu0 0.0
    %788 = vmatprep.subr.mxu0 0.0
    %789 = vmatpush2.msra.mxu0 0.0
    %790 = vmatprep.subr.mxu0 0.0
    %791 = vmatpush2.msra.mxu0 0.0
    %792 = vmatprep.subr.mxu0 0.0
    %793 = vmatpush2.msra.mxu0 0.0
    %794 = vmatprep.subr.mxu0 0.0
    %795 = vmatpush2.msra.mxu0 0.0
    %796 = vmatprep.subr.mxu0 0.0
    %797 = vmatpush2.msra.mxu0 0.0
    %798 = vmatprep.subr.mxu0 0.0
    %799 = vmatpush2.msra.mxu0 0.0
    %800 = vmatprep.subr.mxu0 0.0
    %801 = vmatpush2.msra.mxu0 0.0
    %802 = vmatprep.subr.mxu0 0.0
    %803 = vmatpush2.msra.mxu0 0.0
    %804 = vmatprep.subr.mxu0 0.0
    %805 = vmatpush2.msra.mxu0 0.0
    %806 = vmatprep.subr.mxu0 0.0
    %807 = vmatpush2.msra.mxu0 0.0
    %808 = vmatprep.subr.mxu0 0.0
    %809 = vmatpush2.msra.mxu0 0.0
    %810 = vmatprep.mubr.f32.mxu0 0.0
    %811 = vmatmul.mubr.f32.gmra.mxu0 %v744
    %v812 = vpop.f32.mrf.mxu0
    %v813 = vadd.f32 0.0, %v812
    %v814 = vpop.f32.mrf.mxu0
    %815 = vdwg.mxu0
    %v816 = vsel %vm593, %v813, 0.0
    %v817 = vrot.slane %v816, 4
    %v818 = vadd.f32 %v816, %v817
    %v819 = vrot.slane %v818, 2
    %v820 = vadd.f32 %v818, %v819
    %v821 = vrot.slane %v820, 1
    %v822 = vadd.f32 %v820, %v821
    %v823 = vmul.f32 %v822, %v246
    %v824 = vmul.f32 %v813, %v813
    %v825 = vsel %vm593, %v824, 0.0
    %v826 = vrot.slane %v825, 4
    %v827 = vadd.f32 %v825, %v826
    %v828 = vrot.slane %v827, 2
    %v829 = vadd.f32 %v827, %v828
    %v830 = vrot.slane %v829, 1
    %v831 = vadd.f32 %v829, %v830
    %v832 = vmul.f32 %v831, %v246
    %v833 = vmul.f32 %v823, %v823
    %v834 = vsub.f32 %v832, %v833
    %v835 = vadd.f32 %v834, 1e-05
    %v836 = vrsqrt.pop %v835
    %v837 = vsub.f32 %v813, %v823
    %v838 = vmul.f32 %v836, %v742
    %v839 = vlaneseq
    %v840 = vshrl.u32 %v839, 7
    %v841 = vsub.s32 0, %v840
    %v842 = vrot.slane %v838, %v841
    %v843 = vmul.f32 %v837, %v842
    %v844 = vlaneseq
    %v845 = vshrl.u32 %v844, 7
    %v846 = vsub.s32 1, %v845
    %v847 = vrot.slane %v742, %v846
    %v848 = vadd.f32 %v843, %v847
    %v849 = vmax.f32 %v848, 0.0
    %v850 = vld [vmem:[%s8] sm:$0xff]
    %v851 = vld [vmem:[%s8 + $0x8] sm:$0xff]
    %s852 = scalar_lea.vmem %s1, 36
    %v853 = vld [vmem:[%s852] sm:$0x3f]
    %v855 = vsel %vm593, %v849, 0
    %857 = vmatprep.subr.mxu0 0.0
    %858 = vmatpush1.msra.mxu0 0.0
    %859 = vmatprep.subr.mxu0 0.0
    %860 = vmatpush1.msra.mxu0 0.0
    %861 = vmatprep.subr.mxu0 0.0
    %862 = vmatpush1.msra.mxu0 0.0
    %863 = vmatprep.subr.mxu0 0.0
    %864 = vmatpush1.msra.mxu0 0.0
    %865 = vmatprep.subr.mxu0 0.0
    %866 = vmatpush1.msra.mxu0 0.0
    %867 = vmatprep.subr.mxu0 0.0
    %868 = vmatpush1.msra.mxu0 0.0
    %869 = vmatprep.subr.mxu0 0.0
    %870 = vmatpush1.msra.mxu0 0.0
    %871 = vmatprep.subr.mxu0 0.0
    %872 = vmatpush1.msra.mxu0 0.0
    %873 = vmatprep.subr.mxu0 0.0
    %874 = vmatpush1.msra.mxu0 0.0
    %875 = vmatprep.subr.mxu0 0.0
    %876 = vmatpush1.msra.mxu0 0.0
    %877 = vmatprep.subr.mxu0 0.0
    %878 = vmatpush1.msra.mxu0 0.0
    %879 = vmatprep.subr.mxu0 0.0
    %880 = vmatpush1.msra.mxu0 0.0
    %881 = vmatprep.subr.mxu0 0.0
    %882 = vmatpush1.msra.mxu0 0.0
    %883 = vmatprep.subr.mxu0 0.0
    %884 = vmatpush1.msra.mxu0 0.0
    %885 = vmatprep.subr.mxu0 0.0
    %886 = vmatpush1.msra.mxu0 %v851
    %887 = vmatprep.subr.mxu0 0.0
    %888 = vmatpush1.msra.mxu0 %v850
    %889 = vmatprep.subr.mxu0 0.0
    %890 = vmatpush2.msra.mxu0 0.0
    %891 = vmatprep.subr.mxu0 0.0
    %892 = vmatpush2.msra.mxu0 0.0
    %893 = vmatprep.subr.mxu0 0.0
    %894 = vmatpush2.msra.mxu0 0.0
    %895 = vmatprep.subr.mxu0 0.0
    %896 = vmatpush2.msra.mxu0 0.0
    %897 = vmatprep.subr.mxu0 0.0
    %898 = vmatpush2.msra.mxu0 0.0
    %899 = vmatprep.subr.mxu0 0.0
    %900 = vmatpush2.msra.mxu0 0.0
    %901 = vmatprep.subr.mxu0 0.0
    %902 = vmatpush2.msra.mxu0 0.0
    %903 = vmatprep.subr.mxu0 0.0
    %904 = vmatpush2.msra.mxu0 0.0
    %905 = vmatprep.subr.mxu0 0.0
    %906 = vmatpush2.msra.mxu0 0.0
    %907 = vmatprep.subr.mxu0 0.0
    %908 = vmatpush2.msra.mxu0 0.0
    %909 = vmatprep.subr.mxu0 0.0
    %910 = vmatpush2.msra.mxu0 0.0
    %911 = vmatprep.subr.mxu0 0.0
    %912 = vmatpush2.msra.mxu0 0.0
    %913 = vmatprep.subr.mxu0 0.0
    %914 = vmatpush2.msra.mxu0 0.0
    %915 = vmatprep.subr.mxu0 0.0
    %916 = vmatpush2.msra.mxu0 0.0
    %917 = vmatprep.subr.mxu0 0.0
    %918 = vmatpush2.msra.mxu0 0.0
    %919 = vmatprep.subr.mxu0 0.0
    %920 = vmatpush2.msra.mxu0 0.0
    %921 = vmatprep.mubr.f32.mxu0 0.0
    %922 = vmatmul.mubr.f32.gmra.mxu0 %v855
    %v923 = vpop.f32.mrf.mxu0
    %v924 = vadd.f32 0.0, %v923
    %v925 = vpop.f32.mrf.mxu0
    %926 = vdwg.mxu0
    %v927 = vsel %vm479, %v924, 0.0
    %v928 = vrot.slane %v927, 4
    %v929 = vadd.f32 %v927, %v928
    %v930 = vrot.slane %v929, 2
    %v931 = vadd.f32 %v929, %v930
    %v932 = vrot.slane %v931, 1
    %v933 = vadd.f32 %v931, %v932
    %v934 = vmul.f32 %v933, %v246
    %v935 = vmul.f32 %v924, %v924
    %v936 = vsel %vm479, %v935, 0.0
    %v937 = vrot.slane %v936, 4
    %v938 = vadd.f32 %v936, %v937
    %v939 = vrot.slane %v938, 2
    %v940 = vadd.f32 %v938, %v939
    %v941 = vrot.slane %v940, 1
    %v942 = vadd.f32 %v940, %v941
    %v943 = vmul.f32 %v942, %v246
    %v944 = vmul.f32 %v934, %v934
    %v945 = vsub.f32 %v943, %v944
    %v946 = vadd.f32 %v945, 1e-05
    %v947 = vrsqrt.pop %v946
    %v948 = vsub.f32 %v924, %v934
    %v949 = vmul.f32 %v947, %v853
    %v950 = vlaneseq
    %v951 = vshrl.u32 %v950, 7
    %v952 = vsub.s32 0, %v951
    %v953 = vrot.slane %v949, %v952
    %v954 = vmul.f32 %v948, %v953
    %v955 = vlaneseq
    %v956 = vshrl.u32 %v955, 7
    %v957 = vsub.s32 1, %v956
    %v958 = vrot.slane %v853, %v957
    %v959 = vadd.f32 %v954, %v958
    %v960 = vld [vmem:[%s9] sm:$0xff]
    %v961 = vld [vmem:[%s9 + $0x8] sm:$0xff]
    %v962 = vld [vmem:[%s9 + $0x10] sm:$0xff]
    %v963 = vld [vmem:[%s9 + $0x18] sm:$0xff]
    %s964 = scalar_lea.vmem %s1, 42
    %v965 = vld [vmem:[%s964] sm:$0x3f]
    %v967 = vsel %vm479, %v959, 0
    %969 = vmatprep.subr.mxu0 0.0
    %970 = vmatpush1.msra.mxu0 0.0
    %971 = vmatprep.subr.mxu0 0.0
    %972 = vmatpush1.msra.mxu0 0.0
    %973 = vmatprep.subr.mxu0 0.0
    %974 = vmatpush1.msra.mxu0 0.0
    %975 = vmatprep.subr.mxu0 0.0
    %976 = vmatpush1.msra.mxu0 0.0
    %977 = vmatprep.subr.mxu0 0.0
    %978 = vmatpush1.msra.mxu0 0.0
    %979 = vmatprep.subr.mxu0 0.0
    %980 = vmatpush1.msra.mxu0 0.0
    %981 = vmatprep.subr.mxu0 0.0
    %982 = vmatpush1.msra.mxu0 0.0
    %983 = vmatprep.subr.mxu0 0.0
    %984 = vmatpush1.msra.mxu0 0.0
    %985 = vmatprep.subr.mxu0 0.0
    %986 = vmatpush1.msra.mxu0 0.0
    %987 = vmatprep.subr.mxu0 0.0
    %988 = vmatpush1.msra.mxu0 0.0
    %989 = vmatprep.subr.mxu0 0.0
    %990 = vmatpush1.msra.mxu0 0.0
    %991 = vmatprep.subr.mxu0 0.0
    %992 = vmatpush1.msra.mxu0 0.0
    %993 = vmatprep.subr.mxu0 0.0
    %994 = vmatpush1.msra.mxu0 %v963
    %995 = vmatprep.subr.mxu0 0.0
    %996 = vmatpush1.msra.mxu0 %v962
    %997 = vmatprep.subr.mxu0 0.0
    %998 = vmatpush1.msra.mxu0 %v961
    %999 = vmatprep.subr.mxu0 0.0
    %1000 = vmatpush1.msra.mxu0 %v960
    %1001 = vmatprep.subr.mxu0 0.0
    %1002 = vmatpush2.msra.mxu0 0.0
    %1003 = vmatprep.subr.mxu0 0.0
    %1004 = vmatpush2.msra.mxu0 0.0
    %1005 = vmatprep.subr.mxu0 0.0
    %1006 = vmatpush2.msra.mxu0 0.0
    %1007 = vmatprep.subr.mxu0 0.0
    %1008 = vmatpush2.msra.mxu0 0.0
    %1009 = vmatprep.subr.mxu0 0.0
    %1010 = vmatpush2.msra.mxu0 0.0
    %1011 = vmatprep.subr.mxu0 0.0
    %1012 = vmatpush2.msra.mxu0 0.0
    %1013 = vmatprep.subr.mxu0 0.0
    %1014 = vmatpush2.msra.mxu0 0.0
    %1015 = vmatprep.subr.mxu0 0.0
    %1016 = vmatpush2.msra.mxu0 0.0
    %1017 = vmatprep.subr.mxu0 0.0
    %1018 = vmatpush2.msra.mxu0 0.0
    %1019 = vmatprep.subr.mxu0 0.0
    %1020 = vmatpush2.msra.mxu0 0.0
    %1021 = vmatprep.subr.mxu0 0.0
    %1022 = vmatpush2.msra.mxu0 0.0
    %1023 = vmatprep.subr.mxu0 0.0
    %1024 = vmatpush2.msra.mxu0 0.0
    %1025 = vmatprep.subr.mxu0 0.0
    %1026 = vmatpush2.msra.mxu0 0.0
    %1027 = vmatprep.subr.mxu0 0.0
    %1028 = vmatpush2.msra.mxu0 0.0
    %1029 = vmatprep.subr.mxu0 0.0
    %1030 = vmatpush2.msra.mxu0 0.0
    %1031 = vmatprep.subr.mxu0 0.0
    %1032 = vmatpush2.msra.mxu0 0.0
    %1033 = vmatprep.mubr.f32.mxu0 0.0
    %1034 = vmatmul.mubr.f32.gmra.mxu0 %v967
    %v1035 = vpop.f32.mrf.mxu0
    %v1036 = vadd.f32 0.0, %v1035
    %v1037 = vpop.f32.mrf.mxu0
    %1038 = vdwg.mxu0
    %v1039 = vsel %vm361, %v1036, 0.0
    %v1040 = vrot.slane %v1039, 4
    %v1041 = vadd.f32 %v1039, %v1040
    %v1042 = vrot.slane %v1041, 2
    %v1043 = vadd.f32 %v1041, %v1042
    %v1044 = vrot.slane %v1043, 1
    %v1045 = vadd.f32 %v1043, %v1044
    %v1046 = vmul.f32 %v1045, %v246
    %v1047 = vmul.f32 %v1036, %v1036
    %v1048 = vsel %vm361, %v1047, 0.0
    %v1049 = vrot.slane %v1048, 4
    %v1050 = vadd.f32 %v1048, %v1049
    %v1051 = vrot.slane %v1050, 2
    %v1052 = vadd.f32 %v1050, %v1051
    %v1053 = vrot.slane %v1052, 1
    %v1054 = vadd.f32 %v1052, %v1053
    %v1055 = vmul.f32 %v1054, %v246
    %v1056 = vmul.f32 %v1046, %v1046
    %v1057 = vsub.f32 %v1055, %v1056
    %v1058 = vadd.f32 %v1057, 1e-05
    %v1059 = vrsqrt.pop %v1058
    %v1060 = vsub.f32 %v1036, %v1046
    %v1061 = vmul.f32 %v1059, %v965
    %v1062 = vlaneseq
    %v1063 = vshrl.u32 %v1062, 7
    %v1064 = vsub.s32 0, %v1063
    %v1065 = vrot.slane %v1061, %v1064
    %v1066 = vmul.f32 %v1060, %v1065
    %v1067 = vlaneseq
    %v1068 = vshrl.u32 %v1067, 7
    %v1069 = vsub.s32 1, %v1068
    %v1070 = vrot.slane %v965, %v1069
    %v1071 = vadd.f32 %v1066, %v1070
    %v1072 = vld [vmem:[%s10] sm:$0xff]
    %v1073 = vld [vmem:[%s10 + $0x8] sm:$0xff]
    %v1074 = vld [vmem:[%s10 + $0x10] sm:$0xff]
    %v1075 = vld [vmem:[%s10 + $0x18] sm:$0xff]
    %v1076 = vld [vmem:[%s10 + $0x20] sm:$0xff]
    %v1077 = vld [vmem:[%s10 + $0x28] sm:$0xff]
    %v1078 = vld [vmem:[%s10 + $0x30] sm:$0xff]
    %v1079 = vld [vmem:[%s10 + $0x38] sm:$0xff]
    %s1080 = scalar_lea.vmem %s1, 48
    %v1081 = vld [vmem:[%s1080] sm:$0x3f]
    %v1083 = vsel %vm361, %v1071, 0
    %1085 = vmatprep.subr.mxu0 0.0
    %1086 = vmatpush1.msra.mxu0 0.0
    %1087 = vmatprep.subr.mxu0 0.0
    %1088 = vmatpush1.msra.mxu0 0.0
    %1089 = vmatprep.subr.mxu0 0.0
    %1090 = vmatpush1.msra.mxu0 0.0
    %1091 = vmatprep.subr.mxu0 0.0
    %1092 = vmatpush1.msra.mxu0 0.0
    %1093 = vmatprep.subr.mxu0 0.0
    %1094 = vmatpush1.msra.mxu0 0.0
    %1095 = vmatprep.subr.mxu0 0.0
    %1096 = vmatpush1.msra.mxu0 0.0
    %1097 = vmatprep.subr.mxu0 0.0
    %1098 = vmatpush1.msra.mxu0 0.0
    %1099 = vmatprep.subr.mxu0 0.0
    %1100 = vmatpush1.msra.mxu0 0.0
    %1101 = vmatprep.subr.mxu0 0.0
    %1102 = vmatpush1.msra.mxu0 %v1079
    %1103 = vmatprep.subr.mxu0 0.0
    %1104 = vmatpush1.msra.mxu0 %v1078
    %1105 = vmatprep.subr.mxu0 0.0
    %1106 = vmatpush1.msra.mxu0 %v1077
    %1107 = vmatprep.subr.mxu0 0.0
    %1108 = vmatpush1.msra.mxu0 %v1076
    %1109 = vmatprep.subr.mxu0 0.0
    %1110 = vmatpush1.msra.mxu0 %v1075
    %1111 = vmatprep.subr.mxu0 0.0
    %1112 = vmatpush1.msra.mxu0 %v1074
    %1113 = vmatprep.subr.mxu0 0.0
    %1114 = vmatpush1.msra.mxu0 %v1073
    %1115 = vmatprep.subr.mxu0 0.0
    %1116 = vmatpush1.msra.mxu0 %v1072
    %1117 = vmatprep.subr.mxu0 0.0
    %1118 = vmatpush2.msra.mxu0 0.0
    %1119 = vmatprep.subr.mxu0 0.0
    %1120 = vmatpush2.msra.mxu0 0.0
    %1121 = vmatprep.subr.mxu0 0.0
    %1122 = vmatpush2.msra.mxu0 0.0
    %1123 = vmatprep.subr.mxu0 0.0
    %1124 = vmatpush2.msra.mxu0 0.0
    %1125 = vmatprep.subr.mxu0 0.0
    %1126 = vmatpush2.msra.mxu0 0.0
    %1127 = vmatprep.subr.mxu0 0.0
    %1128 = vmatpush2.msra.mxu0 0.0
    %1129 = vmatprep.subr.mxu0 0.0
    %1130 = vmatpush2.msra.mxu0 0.0
    %1131 = vmatprep.subr.mxu0 0.0
    %1132 = vmatpush2.msra.mxu0 0.0
    %1133 = vmatprep.subr.mxu0 0.0
    %1134 = vmatpush2.msra.mxu0 0.0
    %1135 = vmatprep.subr.mxu0 0.0
    %1136 = vmatpush2.msra.mxu0 0.0
    %1137 = vmatprep.subr.mxu0 0.0
    %1138 = vmatpush2.msra.mxu0 0.0
    %1139 = vmatprep.subr.mxu0 0.0
    %1140 = vmatpush2.msra.mxu0 0.0
    %1141 = vmatprep.subr.mxu0 0.0
    %1142 = vmatpush2.msra.mxu0 0.0
    %1143 = vmatprep.subr.mxu0 0.0
    %1144 = vmatpush2.msra.mxu0 0.0
    %1145 = vmatprep.subr.mxu0 0.0
    %1146 = vmatpush2.msra.mxu0 0.0
    %1147 = vmatprep.subr.mxu0 0.0
    %1148 = vmatpush2.msra.mxu0 0.0
    %1149 = vmatprep.mubr.f32.mxu0 0.0
    %1150 = vmatmul.mubr.f32.gmra.mxu0 %v1083
    %v1151 = vpop.f32.mrf.mxu0
    %v1152 = vadd.f32 0.0, %v1151
    %v1153 = vpop.f32.mrf.mxu0
    %1154 = vdwg.mxu0
    %v1155 = vrot.slane %v1152, 4
    %v1156 = vadd.f32 %v1152, %v1155
    %v1157 = vrot.slane %v1156, 2
    %v1158 = vadd.f32 %v1156, %v1157
    %v1159 = vrot.slane %v1158, 1
    %v1160 = vadd.f32 %v1158, %v1159
    %v1161 = vmul.f32 %v1160, %v246
    %v1162 = vmul.f32 %v1152, %v1152
    %v1163 = vrot.slane %v1162, 4
    %v1164 = vadd.f32 %v1162, %v1163
    %v1165 = vrot.slane %v1164, 2
    %v1166 = vadd.f32 %v1164, %v1165
    %v1167 = vrot.slane %v1166, 1
    %v1168 = vadd.f32 %v1166, %v1167
    %v1169 = vmul.f32 %v1168, %v246
    %v1170 = vmul.f32 %v1161, %v1161
    %v1171 = vsub.f32 %v1169, %v1170
    %v1172 = vadd.f32 %v1171, 1e-05
    %v1173 = vrsqrt.pop %v1172
    %v1174 = vsub.f32 %v1152, %v1161
    %v1175 = vmul.f32 %v1173, %v1081
    %v1176 = vlaneseq
    %v1177 = vshrl.u32 %v1176, 7
    %v1178 = vsub.s32 0, %v1177
    %v1179 = vrot.slane %v1175, %v1178
    %v1180 = vmul.f32 %v1174, %v1179
    %v1181 = vlaneseq
    %v1182 = vshrl.u32 %v1181, 7
    %v1183 = vsub.s32 1, %v1182
    %v1184 = vrot.slane %v1081, %v1183
    %v1185 = vadd.f32 %v1180, %v1184
    %v1186 = vld [vmem:[%s11] sm:$0xff]
    %v1187 = vld [vmem:[%s11 + $0x8] sm:$0xff]
    %v1188 = vld [vmem:[%s11 + $0x10] sm:$0xff]
    %v1189 = vld [vmem:[%s11 + $0x18] sm:$0xff]
    %v1190 = vld [vmem:[%s11 + $0x20] sm:$0xff]
    %v1191 = vld [vmem:[%s11 + $0x28] sm:$0xff]
    %v1192 = vld [vmem:[%s11 + $0x30] sm:$0xff]
    %v1193 = vld [vmem:[%s11 + $0x38] sm:$0xff]
    %v1194 = vld [vmem:[%s11 + $0x40] sm:$0xff]
    %v1195 = vld [vmem:[%s11 + $0x48] sm:$0xff]
    %v1196 = vld [vmem:[%s11 + $0x50] sm:$0xff]
    %v1197 = vld [vmem:[%s11 + $0x58] sm:$0xff]
    %v1198 = vld [vmem:[%s11 + $0x60] sm:$0xff]
    %v1199 = vld [vmem:[%s11 + $0x68] sm:$0xff]
    %v1200 = vld [vmem:[%s11 + $0x70] sm:$0xff]
    %v1201 = vld [vmem:[%s11 + $0x78] sm:$0xff]
    %v1202 = vld [vmem:[%s11 + $0x80] sm:$0xff]
    %v1203 = vld [vmem:[%s11 + $0x88] sm:$0xff]
    %v1204 = vld [vmem:[%s11 + $0x90] sm:$0xff]
    %v1205 = vld [vmem:[%s11 + $0x98] sm:$0xff]
    %v1206 = vld [vmem:[%s11 + $0xa0] sm:$0xff]
    %v1207 = vld [vmem:[%s11 + $0xa8] sm:$0xff]
    %v1208 = vld [vmem:[%s11 + $0xb0] sm:$0xff]
    %v1209 = vld [vmem:[%s11 + $0xb8] sm:$0xff]
    %v1210 = vld [vmem:[%s11 + $0xc0] sm:$0xff]
    %v1211 = vld [vmem:[%s11 + $0xc8] sm:$0xff]
    %v1212 = vld [vmem:[%s11 + $0xd0] sm:$0xff]
    %v1213 = vld [vmem:[%s11 + $0xd8] sm:$0xff]
    %v1214 = vld [vmem:[%s11 + $0xe0] sm:$0xff]
    %v1215 = vld [vmem:[%s11 + $0xe8] sm:$0xff]
    %v1216 = vld [vmem:[%s11 + $0xf0] sm:$0xff]
    %v1217 = vld [vmem:[%s11 + $0xf8] sm:$0xff]
    %v1218 = vld [vmem:[%s11 + $0x100] sm:$0xff]
    %v1219 = vld [vmem:[%s11 + $0x108] sm:$0xff]
    %v1220 = vld [vmem:[%s11 + $0x110] sm:$0xff]
    %v1221 = vld [vmem:[%s11 + $0x118] sm:$0xff]
    %v1222 = vld [vmem:[%s11 + $0x120] sm:$0xff]
    %v1223 = vld [vmem:[%s11 + $0x128] sm:$0xff]
    %v1224 = vld [vmem:[%s11 + $0x130] sm:$0xff]
    %v1225 = vld [vmem:[%s11 + $0x138] sm:$0xff]
    %v1226 = vld [vmem:[%s11 + $0x140] sm:$0xff]
    %v1227 = vld [vmem:[%s11 + $0x148] sm:$0xff]
    %v1228 = vld [vmem:[%s11 + $0x150] sm:$0xff]
    %v1229 = vld [vmem:[%s11 + $0x158] sm:$0xff]
    %v1230 = vld [vmem:[%s11 + $0x160] sm:$0xff]
    %v1231 = vld [vmem:[%s11 + $0x168] sm:$0xff]
    %v1232 = vld [vmem:[%s11 + $0x170] sm:$0xff]
    %v1233 = vld [vmem:[%s11 + $0x178] sm:$0xff]
    %s1234 = scalar_lea.vmem %s1, 54
    %v1235 = vld [vmem:[%s1234] sm:$0x3f]
    %1236 = vmatprep.subr.mxu0 %v1232
    %1237 = vmatpush1.msra.mxu0 %v1231
    %1238 = vmatprep.subr.mxu0 %v1229
    %1239 = vmatpush1.msra.mxu0 %v1228
    %1240 = vmatprep.subr.mxu0 %v1226
    %1241 = vmatpush1.msra.mxu0 %v1225
    %1242 = vmatprep.subr.mxu0 %v1223
    %1243 = vmatpush1.msra.mxu0 %v1222
    %1244 = vmatprep.subr.mxu0 %v1220
    %1245 = vmatpush1.msra.mxu0 %v1219
    %1246 = vmatprep.subr.mxu0 %v1217
    %1247 = vmatpush1.msra.mxu0 %v1216
    %1248 = vmatprep.subr.mxu0 %v1214
    %1249 = vmatpush1.msra.mxu0 %v1213
    %1250 = vmatprep.subr.mxu0 %v1211
    %1251 = vmatpush1.msra.mxu0 %v1210
    %1252 = vmatprep.subr.mxu0 %v1208
    %1253 = vmatpush1.msra.mxu0 %v1207
    %1254 = vmatprep.subr.mxu0 %v1205
    %1255 = vmatpush1.msra.mxu0 %v1204
    %1256 = vmatprep.subr.mxu0 %v1202
    %1257 = vmatpush1.msra.mxu0 %v1201
    %1258 = vmatprep.subr.mxu0 %v1199
    %1259 = vmatpush1.msra.mxu0 %v1198
    %1260 = vmatprep.subr.mxu0 %v1196
    %1261 = vmatpush1.msra.mxu0 %v1195
    %1262 = vmatprep.subr.mxu0 %v1193
    %1263 = vmatpush1.msra.mxu0 %v1192
    %1264 = vmatprep.subr.mxu0 %v1190
    %1265 = vmatpush1.msra.mxu0 %v1189
    %1266 = vmatprep.subr.mxu0 %v1187
    %1267 = vmatpush1.msra.mxu0 %v1186
    %1268 = vmatprep.subr.mxu0 0.0
    %1269 = vmatpush2.msra.mxu0 0.0
    %1270 = vmatprep.subr.mxu0 0.0
    %1271 = vmatpush2.msra.mxu0 0.0
    %1272 = vmatprep.subr.mxu0 0.0
    %1273 = vmatpush2.msra.mxu0 0.0
    %1274 = vmatprep.subr.mxu0 0.0
    %1275 = vmatpush2.msra.mxu0 0.0
    %1276 = vmatprep.subr.mxu0 0.0
    %1277 = vmatpush2.msra.mxu0 0.0
    %1278 = vmatprep.subr.mxu0 0.0
    %1279 = vmatpush2.msra.mxu0 0.0
    %1280 = vmatprep.subr.mxu0 0.0
    %1281 = vmatpush2.msra.mxu0 0.0
    %1282 = vmatprep.subr.mxu0 0.0
    %1283 = vmatpush2.msra.mxu0 0.0
    %1284 = vmatprep.subr.mxu0 0.0
    %1285 = vmatpush2.msra.mxu0 0.0
    %1286 = vmatprep.subr.mxu0 0.0
    %1287 = vmatpush2.msra.mxu0 0.0
    %1288 = vmatprep.subr.mxu0 0.0
    %1289 = vmatpush2.msra.mxu0 0.0
    %1290 = vmatprep.subr.mxu0 0.0
    %1291 = vmatpush2.msra.mxu0 0.0
    %1292 = vmatprep.subr.mxu0 0.0
    %1293 = vmatpush2.msra.mxu0 0.0
    %1294 = vmatprep.subr.mxu0 0.0
    %1295 = vmatpush2.msra.mxu0 0.0
    %1296 = vmatprep.subr.mxu0 0.0
    %1297 = vmatpush2.msra.mxu0 0.0
    %1298 = vmatprep.subr.mxu0 0.0
    %1299 = vmatpush2.msra.mxu0 0.0
    %1300 = vmatprep.mubr.f32.mxu0 0.0
    %1301 = vmatmul.mubr.f32.gmra.mxu0 %v1185
    %v1302 = vpop.f32.mrf.mxu0
    %v1303 = vadd.f32 0.0, %v1302
    %v1304 = vpop.f32.mrf.mxu0
    %v1305 = vadd.f32 0.0, %v1304
    %1306 = vdwg.mxu0
    %1307 = vmatprep.subr.mxu0 0.0
    %1308 = vmatpush1.msra.mxu0 %v1233
    %1309 = vmatprep.subr.mxu0 0.0
    %1310 = vmatpush1.msra.mxu0 %v1230
    %1311 = vmatprep.subr.mxu0 0.0
    %1312 = vmatpush1.msra.mxu0 %v1227
    %1313 = vmatprep.subr.mxu0 0.0
    %1314 = vmatpush1.msra.mxu0 %v1224
    %1315 = vmatprep.subr.mxu0 0.0
    %1316 = vmatpush1.msra.mxu0 %v1221
    %1317 = vmatprep.subr.mxu0 0.0
    %1318 = vmatpush1.msra.mxu0 %v1218
    %1319 = vmatprep.subr.mxu0 0.0
    %1320 = vmatpush1.msra.mxu0 %v1215
    %1321 = vmatprep.subr.mxu0 0.0
    %1322 = vmatpush1.msra.mxu0 %v1212
    %1323 = vmatprep.subr.mxu0 0.0
    %1324 = vmatpush1.msra.mxu0 %v1209
    %1325 = vmatprep.subr.mxu0 0.0
    %1326 = vmatpush1.msra.mxu0 %v1206
    %1327 = vmatprep.subr.mxu0 0.0
    %1328 = vmatpush1.msra.mxu0 %v1203
    %1329 = vmatprep.subr.mxu0 0.0
    %1330 = vmatpush1.msra.mxu0 %v1200
    %1331 = vmatprep.subr.mxu0 0.0
    %1332 = vmatpush1.msra.mxu0 %v1197
    %1333 = vmatprep.subr.mxu0 0.0
    %1334 = vmatpush1.msra.mxu0 %v1194
    %1335 = vmatprep.subr.mxu0 0.0
    %1336 = vmatpush1.msra.mxu0 %v1191
    %1337 = vmatprep.subr.mxu0 0.0
    %1338 = vmatpush1.msra.mxu0 %v1188
    %1339 = vmatprep.subr.mxu0 0.0
    %1340 = vmatpush2.msra.mxu0 0.0
    %1341 = vmatprep.subr.mxu0 0.0
    %1342 = vmatpush2.msra.mxu0 0.0
    %1343 = vmatprep.subr.mxu0 0.0
    %1344 = vmatpush2.msra.mxu0 0.0
    %1345 = vmatprep.subr.mxu0 0.0
    %1346 = vmatpush2.msra.mxu0 0.0
    %1347 = vmatprep.subr.mxu0 0.0
    %1348 = vmatpush2.msra.mxu0 0.0
    %1349 = vmatprep.subr.mxu0 0.0
    %1350 = vmatpush2.msra.mxu0 0.0
    %1351 = vmatprep.subr.mxu0 0.0
    %1352 = vmatpush2.msra.mxu0 0.0
    %1353 = vmatprep.subr.mxu0 0.0
    %1354 = vmatpush2.msra.mxu0 0.0
    %1355 = vmatprep.subr.mxu0 0.0
    %1356 = vmatpush2.msra.mxu0 0.0
    %1357 = vmatprep.subr.mxu0 0.0
    %1358 = vmatpush2.msra.mxu0 0.0
    %1359 = vmatprep.subr.mxu0 0.0
    %1360 = vmatpush2.msra.mxu0 0.0
    %1361 = vmatprep.subr.mxu0 0.0
    %1362 = vmatpush2.msra.mxu0 0.0
    %1363 = vmatprep.subr.mxu0 0.0
    %1364 = vmatpush2.msra.mxu0 0.0
    %1365 = vmatprep.subr.mxu0 0.0
    %1366 = vmatpush2.msra.mxu0 0.0
    %1367 = vmatprep.subr.mxu0 0.0
    %1368 = vmatpush2.msra.mxu0 0.0
    %1369 = vmatprep.subr.mxu0 0.0
    %1370 = vmatpush2.msra.mxu0 0.0
    %1371 = vmatprep.mubr.f32.mxu0 0.0
    %1372 = vmatmul.mubr.f32.gmra.mxu0 %v1185
    %v1373 = vpop.f32.mrf.mxu0
    %v1374 = vadd.f32 0.0, %v1373
    %v1375 = vpop.f32.mrf.mxu0
    %1376 = vdwg.mxu0
    %v1377 = vrot.slane %v1303, 4
    %v1378 = vadd.f32 %v1303, %v1377
    %v1379 = vrot.slane %v1378, 2
    %v1380 = vadd.f32 %v1378, %v1379
    %v1381 = vrot.slane %v1380, 1
    %v1382 = vadd.f32 %v1380, %v1381
    %v1383 = vrot.slane %v1305, 4
    %v1384 = vadd.f32 %v1305, %v1383
    %v1385 = vrot.slane %v1384, 2
    %v1386 = vadd.f32 %v1384, %v1385
    %v1387 = vrot.slane %v1386, 1
    %v1388 = vadd.f32 %v1386, %v1387
    %v1389 = vrot.slane %v1374, 4
    %v1390 = vadd.f32 %v1374, %v1389
    %v1391 = vrot.slane %v1390, 2
    %v1392 = vadd.f32 %v1390, %v1391
    %v1393 = vrot.slane %v1392, 1
    %v1394 = vadd.f32 %v1392, %v1393
    %v1395 = vmul.f32 %v1382, %v246
    %v1396 = vmul.f32 %v1388, %v246
    %v1397 = vmul.f32 %v1394, %v246
    %v1398 = vmul.f32 %v1303, %v1303
    %v1399 = vmul.f32 %v1305, %v1305
    %v1400 = vmul.f32 %v1374, %v1374
    %v1401 = vrot.slane %v1398, 4
    %v1402 = vadd.f32 %v1398, %v1401
    %v1403 = vrot.slane %v1402, 2
    %v1404 = vadd.f32 %v1402, %v1403
    %v1405 = vrot.slane %v1404, 1
    %v1406 = vadd.f32 %v1404, %v1405
    %v1407 = vrot.slane %v1399, 4
    %v1408 = vadd.f32 %v1399, %v1407
    %v1409 = vrot.slane %v1408, 2
    %v1410 = vadd.f32 %v1408, %v1409
    %v1411 = vrot.slane %v1410, 1
    %v1412 = vadd.f32 %v1410, %v1411
    %v1413 = vrot.slane %v1400, 4
    %v1414 = vadd.f32 %v1400, %v1413
    %v1415 = vrot.slane %v1414, 2
    %v1416 = vadd.f32 %v1414, %v1415
    %v1417 = vrot.slane %v1416, 1
    %v1418 = vadd.f32 %v1416, %v1417
    %v1419 = vmul.f32 %v1406, %v246
    %v1420 = vmul.f32 %v1412, %v246
    %v1421 = vmul.f32 %v1418, %v246
    %v1422 = vmul.f32 %v1395, %v1395
    %v1423 = vmul.f32 %v1396, %v1396
    %v1424 = vmul.f32 %v1397, %v1397
    %v1425 = vsub.f32 %v1419, %v1422
    %v1426 = vsub.f32 %v1420, %v1423
    %v1427 = vsub.f32 %v1421, %v1424
    %v1428 = vadd.f32 %v1425, 1e-05
    %v1429 = vadd.f32 %v1426, 1e-05
    %v1430 = vadd.f32 %v1427, 1e-05
    %v1431 = vrsqrt.pop %v1428
    %v1432 = vrsqrt.pop %v1429
    %v1433 = vrsqrt.pop %v1430
    %v1434 = vsub.f32 %v1303, %v1395
    %v1435 = vsub.f32 %v1305, %v1396
    %v1436 = vsub.f32 %v1374, %v1397
    %v1438 = vlaneseq
    %v1439 = vshrl.u32 %v1438, 7
    %v1440 = vsub.s32 0, %v1439
    %v1441 = vrot.slane %v1235, %v1440
    %v1442 = vlaneseq
    %v1443 = vshrl.u32 %v1442, 7
    %v1444 = vsub.s32 2, %v1443
    %v1445 = vrot.slane %v1235, %v1444
    %v1446 = vlaneseq
    %v1447 = vshrl.u32 %v1446, 7
    %v1448 = vsub.s32 4, %v1447
    %v1449 = vrot.slane %v1235, %v1448
    %v1453 = vmul.f32 %v1431, %v1441
    %v1454 = vmul.f32 %v1432, %v1445
    %v1455 = vmul.f32 %v1433, %v1449
    %v1456 = vlaneseq
    %v1457 = vshrl.u32 %v1456, 7
    %v1458 = vsub.s32 0, %v1457
    %v1459 = vrot.slane %v1453, %v1458
    %v1460 = vlaneseq
    %v1461 = vshrl.u32 %v1460, 7
    %v1462 = vsub.s32 0, %v1461
    %v1463 = vrot.slane %v1454, %v1462
    %v1464 = vlaneseq
    %v1465 = vshrl.u32 %v1464, 7
    %v1466 = vsub.s32 0, %v1465
    %v1467 = vrot.slane %v1455, %v1466
    %v1468 = vmul.f32 %v1434, %v1459
    %v1469 = vmul.f32 %v1435, %v1463
    %v1470 = vmul.f32 %v1436, %v1467
    %v1471 = vlaneseq
    %v1472 = vshrl.u32 %v1471, 7
    %v1473 = vsub.s32 1, %v1472
    %v1474 = vrot.slane %v1235, %v1473
    %v1475 = vlaneseq
    %v1476 = vshrl.u32 %v1475, 7
    %v1477 = vsub.s32 3, %v1476
    %v1478 = vrot.slane %v1235, %v1477
    %v1479 = vlaneseq
    %v1480 = vshrl.u32 %v1479, 7
    %v1481 = vsub.s32 5, %v1480
    %v1482 = vrot.slane %v1235, %v1481
    %v1486 = vlaneseq
    %v1487 = vshrl.u32 %v1486, 7
    %v1488 = vsub.s32 1, %v1487
    %v1489 = vrot.slane %v1474, %v1488
    %v1490 = vlaneseq
    %v1491 = vshrl.u32 %v1490, 7
    %v1492 = vsub.s32 1, %v1491
    %v1493 = vrot.slane %v1478, %v1492
    %v1494 = vlaneseq
    %v1495 = vshrl.u32 %v1494, 7
    %v1496 = vsub.s32 1, %v1495
    %v1497 = vrot.slane %v1482, %v1496
    %v1498 = vadd.f32 %v1468, %v1489
    %v1499 = vadd.f32 %v1469, %v1493
    %v1500 = vadd.f32 %v1470, %v1497
    %v1501 = vmul.f32 %v1498, 20.57
    %v1502 = vmul.f32 %v1499, 20.57
    %v1503 = vmul.f32 %v1500, 20.57
    %v1504 = vadd.f32 %v1501, -22.88
    %v1505 = vadd.f32 %v1502, -22.88
    %v1506 = vadd.f32 %v1503, -22.88
    %1507 = vst [vmem:[#allocation2] sm:$0xff] %v1504
    %1508 = vst [vmem:[#allocation2 + $0x8] sm:$0xff] %v1505
    %1509 = vst [vmem:[#allocation2 + $0x10] sm:$0xff] %v1506
    // Predicated region
    $region50: #{autoencoder_forward.1} parent=1 // pred_check
      _
    $region51: #{autoencoder_forward.1} parent=1 // pred_check_branch
      %1511 = sbr.rel (0) target = $region53
    $region52: #{autoencoder_forward.1} parent=1 // pred_region
      %s1513 = ssub.s32 384, 384
      %1514 = vsyncadd [#allocation3], %s1513
      %s1516 = sshll.u32 [#allocation2], 4
      %s1517 = int_to_ptr.vmem [resolvable:$true] %s1516
      %1519 = dma.vmem_to_hbm [thread:$0]  %s1517, 384, %s12, [#allocation3]
    $region53: #{autoencoder_forward.1} parent=1 // pred_fallthru
      _
    // Predicated region
    $region54: #{autoencoder_forward.1} parent=1 // pred_check
      _
    $region55: #{autoencoder_forward.1} parent=1 // pred_check_branch
      %1521 = sbr.rel (0) target = $region57
    $region56: #{autoencoder_forward.1} parent=1 // pred_region
      %1522 = dma.done [#allocation3], 384
    $region57: #{autoencoder_forward.1} parent=1 // pred_fallthru
      _
    %1523 = vsyncpa [#allocation3], 1

</llo_original>
